<compile_context>
chip_gen: v7x
topology: tpu7x:2x2x1
jax: 0.10.0
libtpu: 0.0.40
codegen_flags: <defaults>
</compile_context>

<pallas_src>
import functools
import math

import numpy as np
import jax
import jax.numpy as jnp
from jax.experimental import pallas as pl
from jax.experimental.pallas import tpu as pltpu

# ---------------------------------------------------------------------------
# Fixed 9 derivative-like 3x3 filters, L2-normalized (as in conv3.__init__).
# ---------------------------------------------------------------------------
_KER_RAW = np.array(
    [[[0.0, 0.0, 0.0], [0.0, 1.0, 0.0], [0.0, 0.0, 0.0]],
     [[0.0, 0.0, 0.0], [-0.5, 0.0, 0.5], [0.0, 0.0, 0.0]],
     [[0.0, 0.5, 0.0], [0.0, 0.0, 0.0], [0.0, -0.5, 0.0]],
     [[0.0, 0.0, 0.0], [1.0, -2.0, 1.0], [0.0, 0.0, 0.0]],
     [[0.0, 1.0, 0.0], [0.0, -2.0, 0.0], [0.0, 1.0, 0.0]],
     [[-0.25, 0.0, 0.25], [0.0, 0.0, 0.0], [0.25, 0.0, -0.25]],
     [[0.5, -1.0, 0.5], [0.0, 0.0, 0.0], [-0.5, 1.0, -0.5]],
     [[-0.5, 0.0, 0.5], [1.0, 0.0, -1.0], [-0.5, 0.0, 0.5]],
     [[1.0, -2.0, 1.0], [-2.0, 4.0, -2.0], [1.0, -2.0, 1.0]]],
    dtype=np.float32)
_KER = _KER_RAW / np.sqrt((_KER_RAW ** 2).sum(axis=(1, 2), keepdims=True))  # (9,3,3)


# ---------------------------------------------------------------------------
# Pallas kernel: one batch-block (Nb images) per grid step.
#   xp_ref : (Nb, C, H+2, W+2) f32   zero-padded input images
#   w_ref  : (9, O, C)         bf16  tap-folded pointwise weights
#   b_ref  : (O, 1)            f32   bias
#   o_ref  : (Nb, O, Ho*Wo)    f32   lane-dense flattened-spatial output
# ---------------------------------------------------------------------------
def _conv3_kernel(xp_ref, w_ref, b_ref, o_ref, *, C, H, W, O, stride, Nb):
    Ho = (H - 1) // stride + 1
    Wo = (W - 1) // stride + 1
    S = Ho * Wo

    w = w_ref[...]        # (9, O, C), resident for the whole block
    bias = b_ref[...]     # (O, 1)

    for n in range(Nb):   # static unroll over the batch block
        xp = xp_ref[n]    # (C, H+2, W+2)
        acc = None
        for t in range(9):
            dy, dx = divmod(t, 3)
            # stride applied in the source slice (no full-res intermediate)
            slab = xp[:, dy:dy + H:stride, dx:dx + W:stride]       # (C, Ho, Wo)
            slab = slab.reshape(C, S).astype(w.dtype)              # lane-dense (C, S)
            contrib = jnp.dot(w[t], slab,
                              preferred_element_type=jnp.float32)  # (O, S) f32
            acc = contrib if acc is None else acc + contrib
        o_ref[n] = (acc + bias).astype(o_ref.dtype)


def conv3_forward(x, weight, bias=None, stride=1):
    """x: (N, C, H, W) f32; weight: (O, 9*C, 1, 1); bias: (O,) or None."""
    N, C, H, W = x.shape
    O = weight.shape[0]
    Ho = (H - 1) // stride + 1
    Wo = (W - 1) // stride + 1
    S = Ho * Wo

    # ---- fold the 9 fixed 3x3 filters into the pointwise weights (wrapper-side) ----
    ker_flat = jnp.asarray(_KER.reshape(9, 9))                       # (k, t), t = dy*3+dx
    w_r = weight.reshape(O, C, 9).astype(jnp.float32)                # [o, c, k] (= weight[o, c*9+k])
    w_eff = jnp.einsum('ock,kt->toc', w_r, ker_flat)                 # (9, O, C)
    w_eff = w_eff.astype(jnp.bfloat16)                               # MXU-native operand dtype

    b2 = (jnp.zeros((O,), jnp.float32) if bias is None
          else bias.astype(jnp.float32)).reshape(O, 1)

    # ---- choose the batch-block size Nb from a conservative VMEM budget ----
    # double-buffered input tile + output tile per image (f32)
    bytes_per_n = (C * (H + 2) * (W + 2) * 4 + O * S * 4) * 2
    vmem_budget = 8 * 1024 * 1024          # fits v5e's 16 MiB scoped default comfortably
    nb = max(1, min(N, vmem_budget // max(1, bytes_per_n), 8))
    if N >= 2:
        # keep at least 2 parallel grid steps so the v7x megacore has work on both TCs
        nb = min(nb, (N + 1) // 2)
    n_blocks = -(-N // nb)
    Np = n_blocks * nb

    # batch-pad to a multiple of Nb, spatial zero-pad by 1 (padding=1 of the 3x3 conv)
    xp = jnp.pad(x.astype(jnp.float32), ((0, Np - N), (0, 0), (1, 1), (1, 1)))

    kern = functools.partial(_conv3_kernel, C=C, H=H, W=W, O=O, stride=stride, Nb=nb)

    out_flat = pl.pallas_call(
        kern,
        out_shape=jax.ShapeDtypeStruct((Np, O, S), jnp.float32),
        grid=(n_blocks,),
        in_specs=[
            pl.BlockSpec((nb, C, H + 2, W + 2), lambda n: (n, 0, 0, 0)),
            pl.BlockSpec((9, O, C), lambda n: (0, 0, 0)),
            pl.BlockSpec((O, 1), lambda n: (0, 0)),
        ],
        out_specs=pl.BlockSpec((nb, O, S), lambda n: (n, 0, 0)),
        compiler_params=pltpu.CompilerParams(
            dimension_semantics=("parallel",),
            vmem_limit_bytes=32 * 1024 * 1024),
    )(xp, w_eff, b2)

    # lane-dense (Np, O, Ho*Wo) -> NCHW, drop batch padding (wrapper-side layout plumbing)
    return out_flat[:N].reshape(N, O, Ho, Wo)


# ---------------------------------------------------------------------------
# Pure-JAX reference (same math via lax.conv, full f32) for a correctness check.
# ---------------------------------------------------------------------------
def _reference(x, weight, bias, stride):
    C = x.shape[1]
    ker = jnp.asarray(_KER)                                    # (9, 3, 3)
    kfull = jnp.tile(ker, (C, 1, 1)).reshape(9 * C, 1, 3, 3)   # channel index c*9+k
    x1 = jax.lax.conv_general_dilated(
        x, kfull, window_strides=(1, 1), padding=((1, 1), (1, 1)),
        feature_group_count=C, dimension_numbers=("NCHW", "OIHW", "NCHW"))
    out = jax.lax.conv_general_dilated(
        x1, weight, window_strides=(stride, stride), padding="VALID",
        dimension_numbers=("NCHW", "OIHW", "NCHW"))
    if bias is not None:
        out = out + bias.reshape(1, -1, 1, 1)
    return out


if __name__ == "__main__":
    # Small shapes consistent with the module: N=2, C=4, H=W=16, out_channel=8.
    N, C, H, W, O = 2, 4, 16, 16, 8
    stride = 1

    key = jax.random.PRNGKey(0)
    kx, kw = jax.random.split(key)
    x = jax.random.normal(kx, (N, C, H, W), dtype=jnp.float32)
    # weight init: 1/(3*sqrt(C)) * randn(O, 9*C, 1, 1); bias init: zeros(O)
    weight = (1.0 / (3.0 * math.sqrt(C))) * jax.random.normal(
        kw, (O, 9 * C, 1, 1), dtype=jnp.float32)
    bias = jnp.zeros((O,), dtype=jnp.float32)

    out = conv3_forward(x, weight, bias, stride=stride)
    out = jax.block_until_ready(out)

    ref = jax.block_until_ready(_reference(x, weight, bias, stride))
    assert out.shape == ref.shape, (out.shape, ref.shape)
    # Tolerance loosened vs the f32 reference because the MXU operands are bf16.
    assert np.allclose(np.asarray(out), np.asarray(ref), atol=5e-2, rtol=5e-2), (
        float(np.max(np.abs(np.asarray(out) - np.asarray(ref)))))

    print("KERNEL_OK")
</pallas_src>

<mosaic_0001>
module attributes {stable_mosaic.version = 11 : i64} {
  func.func @_conv3_kernel(%arg0: i32, %arg1: memref<1x4x18x18xf32, #tpu.memory_space<vmem>>, %arg2: memref<9x8x4xbf16, #tpu.memory_space<vmem>>, %arg3: memref<8x1xf32, #tpu.memory_space<vmem>>, %arg4: memref<1x8x256xf32, #tpu.memory_space<vmem>>) attributes {dimension_semantics = [#tpu.dimension_semantics<parallel>], iteration_bounds = array<i64: 2>, scalar_prefetch = 0 : i64, scratch_operands = 0 : i64, tpu.core_type = #tpu.core_type<tc>, window_params = [{transform_indices = @transform_0, window_bounds = array<i64: 1, 4, 18, 18>}, {pipeline_mode = #tpu.pipeline_mode<synchronous>, transform_indices = @transform_1, window_bounds = array<i64: 9, 8, 4>}, {pipeline_mode = #tpu.pipeline_mode<synchronous>, transform_indices = @transform_2, window_bounds = array<i64: 8, 1>}, {transform_indices = @transform_3, window_bounds = array<i64: 1, 8, 256>}]} {
    %c0 = arith.constant 0 : index
    %c0_0 = arith.constant 0 : index
    %c0_1 = arith.constant 0 : index
    %0 = vector.load %arg2[%c0, %c0_0, %c0_1] : memref<9x8x4xbf16, #tpu.memory_space<vmem>>, vector<9x8x4xbf16>
    %c0_2 = arith.constant 0 : index
    %c0_3 = arith.constant 0 : index
    %1 = vector.load %arg3[%c0_2, %c0_3] : memref<8x1xf32, #tpu.memory_space<vmem>>, vector<8x1xf32>
    %c0_4 = arith.constant 0 : index
    %c0_5 = arith.constant 0 : index
    %c0_6 = arith.constant 0 : index
    %c0_7 = arith.constant 0 : index
    %2 = vector.load %arg1[%c0_4, %c0_5, %c0_6, %c0_7] : memref<1x4x18x18xf32, #tpu.memory_space<vmem>>, vector<1x4x18x18xf32>
    %3 = vector.shape_cast %2 : vector<1x4x18x18xf32> to vector<4x18x18xf32>
    %4 = vector.extract_strided_slice %3 {offsets = [0, 0, 0], sizes = [4, 16, 16], strides = [1, 1, 1]} : vector<4x18x18xf32> to vector<4x16x16xf32>
    %5 = vector.shape_cast %4 : vector<4x16x16xf32> to vector<4x256xf32>
    %6 = arith.truncf %5 : vector<4x256xf32> to vector<4x256xbf16>
    %7 = vector.extract_strided_slice %0 {offsets = [0, 0, 0], sizes = [1, 8, 4], strides = [1, 1, 1]} : vector<9x8x4xbf16> to vector<1x8x4xbf16>
    %8 = vector.shape_cast %7 : vector<1x8x4xbf16> to vector<8x4xbf16>
    %cst = arith.constant dense<0.000000e+00> : vector<8x256xf32>
    %9 = tpu.matmul %8, %6, %cst {dimension_numbers = #tpu.dot_dimension_numbers<[1], [0], [0], [1], [0, 0, 1, 1], [], []>} : vector<8x4xbf16>, vector<4x256xbf16>, vector<8x256xf32> -> vector<8x256xf32>
    %10 = vector.extract_strided_slice %3 {offsets = [0, 0, 1], sizes = [4, 16, 16], strides = [1, 1, 1]} : vector<4x18x18xf32> to vector<4x16x16xf32>
    %11 = vector.shape_cast %10 : vector<4x16x16xf32> to vector<4x256xf32>
    %12 = arith.truncf %11 : vector<4x256xf32> to vector<4x256xbf16>
    %13 = vector.extract_strided_slice %0 {offsets = [1, 0, 0], sizes = [1, 8, 4], strides = [1, 1, 1]} : vector<9x8x4xbf16> to vector<1x8x4xbf16>
    %14 = vector.shape_cast %13 : vector<1x8x4xbf16> to vector<8x4xbf16>
    %cst_8 = arith.constant dense<0.000000e+00> : vector<8x256xf32>
    %15 = tpu.matmul %14, %12, %cst_8 {dimension_numbers = #tpu.dot_dimension_numbers<[1], [0], [0], [1], [0, 0, 1, 1], [], []>} : vector<8x4xbf16>, vector<4x256xbf16>, vector<8x256xf32> -> vector<8x256xf32>
    %16 = arith.addf %9, %15 : vector<8x256xf32>
    %17 = vector.extract_strided_slice %3 {offsets = [0, 0, 2], sizes = [4, 16, 16], strides = [1, 1, 1]} : vector<4x18x18xf32> to vector<4x16x16xf32>
    %18 = vector.shape_cast %17 : vector<4x16x16xf32> to vector<4x256xf32>
    %19 = arith.truncf %18 : vector<4x256xf32> to vector<4x256xbf16>
    %20 = vector.extract_strided_slice %0 {offsets = [2, 0, 0], sizes = [1, 8, 4], strides = [1, 1, 1]} : vector<9x8x4xbf16> to vector<1x8x4xbf16>
    %21 = vector.shape_cast %20 : vector<1x8x4xbf16> to vector<8x4xbf16>
    %cst_9 = arith.constant dense<0.000000e+00> : vector<8x256xf32>
    %22 = tpu.matmul %21, %19, %cst_9 {dimension_numbers = #tpu.dot_dimension_numbers<[1], [0], [0], [1], [0, 0, 1, 1], [], []>} : vector<8x4xbf16>, vector<4x256xbf16>, vector<8x256xf32> -> vector<8x256xf32>
    %23 = arith.addf %16, %22 : vector<8x256xf32>
    %24 = vector.extract_strided_slice %3 {offsets = [0, 1, 0], sizes = [4, 16, 16], strides = [1, 1, 1]} : vector<4x18x18xf32> to vector<4x16x16xf32>
    %25 = vector.shape_cast %24 : vector<4x16x16xf32> to vector<4x256xf32>
    %26 = arith.truncf %25 : vector<4x256xf32> to vector<4x256xbf16>
    %27 = vector.extract_strided_slice %0 {offsets = [3, 0, 0], sizes = [1, 8, 4], strides = [1, 1, 1]} : vector<9x8x4xbf16> to vector<1x8x4xbf16>
    %28 = vector.shape_cast %27 : vector<1x8x4xbf16> to vector<8x4xbf16>
    %cst_10 = arith.constant dense<0.000000e+00> : vector<8x256xf32>
    %29 = tpu.matmul %28, %26, %cst_10 {dimension_numbers = #tpu.dot_dimension_numbers<[1], [0], [0], [1], [0, 0, 1, 1], [], []>} : vector<8x4xbf16>, vector<4x256xbf16>, vector<8x256xf32> -> vector<8x256xf32>
    %30 = arith.addf %23, %29 : vector<8x256xf32>
    %31 = vector.extract_strided_slice %3 {offsets = [0, 1, 1], sizes = [4, 16, 16], strides = [1, 1, 1]} : vector<4x18x18xf32> to vector<4x16x16xf32>
    %32 = vector.shape_cast %31 : vector<4x16x16xf32> to vector<4x256xf32>
    %33 = arith.truncf %32 : vector<4x256xf32> to vector<4x256xbf16>
    %34 = vector.extract_strided_slice %0 {offsets = [4, 0, 0], sizes = [1, 8, 4], strides = [1, 1, 1]} : vector<9x8x4xbf16> to vector<1x8x4xbf16>
    %35 = vector.shape_cast %34 : vector<1x8x4xbf16> to vector<8x4xbf16>
    %cst_11 = arith.constant dense<0.000000e+00> : vector<8x256xf32>
    %36 = tpu.matmul %35, %33, %cst_11 {dimension_numbers = #tpu.dot_dimension_numbers<[1], [0], [0], [1], [0, 0, 1, 1], [], []>} : vector<8x4xbf16>, vector<4x256xbf16>, vector<8x256xf32> -> vector<8x256xf32>
    %37 = arith.addf %30, %36 : vector<8x256xf32>
    %38 = vector.extract_strided_slice %3 {offsets = [0, 1, 2], sizes = [4, 16, 16], strides = [1, 1, 1]} : vector<4x18x18xf32> to vector<4x16x16xf32>
    %39 = vector.shape_cast %38 : vector<4x16x16xf32> to vector<4x256xf32>
    %40 = arith.truncf %39 : vector<4x256xf32> to vector<4x256xbf16>
    %41 = vector.extract_strided_slice %0 {offsets = [5, 0, 0], sizes = [1, 8, 4], strides = [1, 1, 1]} : vector<9x8x4xbf16> to vector<1x8x4xbf16>
    %42 = vector.shape_cast %41 : vector<1x8x4xbf16> to vector<8x4xbf16>
    %cst_12 = arith.constant dense<0.000000e+00> : vector<8x256xf32>
    %43 = tpu.matmul %42, %40, %cst_12 {dimension_numbers = #tpu.dot_dimension_numbers<[1], [0], [0], [1], [0, 0, 1, 1], [], []>} : vector<8x4xbf16>, vector<4x256xbf16>, vector<8x256xf32> -> vector<8x256xf32>
    %44 = arith.addf %37, %43 : vector<8x256xf32>
    %45 = vector.extract_strided_slice %3 {offsets = [0, 2, 0], sizes = [4, 16, 16], strides = [1, 1, 1]} : vector<4x18x18xf32> to vector<4x16x16xf32>
    %46 = vector.shape_cast %45 : vector<4x16x16xf32> to vector<4x256xf32>
    %47 = arith.truncf %46 : vector<4x256xf32> to vector<4x256xbf16>
    %48 = vector.extract_strided_slice %0 {offsets = [6, 0, 0], sizes = [1, 8, 4], strides = [1, 1, 1]} : vector<9x8x4xbf16> to vector<1x8x4xbf16>
    %49 = vector.shape_cast %48 : vector<1x8x4xbf16> to vector<8x4xbf16>
    %cst_13 = arith.constant dense<0.000000e+00> : vector<8x256xf32>
    %50 = tpu.matmul %49, %47, %cst_13 {dimension_numbers = #tpu.dot_dimension_numbers<[1], [0], [0], [1], [0, 0, 1, 1], [], []>} : vector<8x4xbf16>, vector<4x256xbf16>, vector<8x256xf32> -> vector<8x256xf32>
    %51 = arith.addf %44, %50 : vector<8x256xf32>
    %52 = vector.extract_strided_slice %3 {offsets = [0, 2, 1], sizes = [4, 16, 16], strides = [1, 1, 1]} : vector<4x18x18xf32> to vector<4x16x16xf32>
    %53 = vector.shape_cast %52 : vector<4x16x16xf32> to vector<4x256xf32>
    %54 = arith.truncf %53 : vector<4x256xf32> to vector<4x256xbf16>
    %55 = vector.extract_strided_slice %0 {offsets = [7, 0, 0], sizes = [1, 8, 4], strides = [1, 1, 1]} : vector<9x8x4xbf16> to vector<1x8x4xbf16>
    %56 = vector.shape_cast %55 : vector<1x8x4xbf16> to vector<8x4xbf16>
    %cst_14 = arith.constant dense<0.000000e+00> : vector<8x256xf32>
    %57 = tpu.matmul %56, %54, %cst_14 {dimension_numbers = #tpu.dot_dimension_numbers<[1], [0], [0], [1], [0, 0, 1, 1], [], []>} : vector<8x4xbf16>, vector<4x256xbf16>, vector<8x256xf32> -> vector<8x256xf32>
    %58 = arith.addf %51, %57 : vector<8x256xf32>
    %59 = vector.extract_strided_slice %3 {offsets = [0, 2, 2], sizes = [4, 16, 16], strides = [1, 1, 1]} : vector<4x18x18xf32> to vector<4x16x16xf32>
    %60 = vector.shape_cast %59 : vector<4x16x16xf32> to vector<4x256xf32>
    %61 = arith.truncf %60 : vector<4x256xf32> to vector<4x256xbf16>
    %62 = vector.extract_strided_slice %0 {offsets = [8, 0, 0], sizes = [1, 8, 4], strides = [1, 1, 1]} : vector<9x8x4xbf16> to vector<1x8x4xbf16>
    %63 = vector.shape_cast %62 : vector<1x8x4xbf16> to vector<8x4xbf16>
    %cst_15 = arith.constant dense<0.000000e+00> : vector<8x256xf32>
    %64 = tpu.matmul %63, %61, %cst_15 {dimension_numbers = #tpu.dot_dimension_numbers<[1], [0], [0], [1], [0, 0, 1, 1], [], []>} : vector<8x4xbf16>, vector<4x256xbf16>, vector<8x256xf32> -> vector<8x256xf32>
    %65 = arith.addf %58, %64 : vector<8x256xf32>
    %66 = vector.broadcast %1 : vector<8x1xf32> to vector<8x256xf32>
    %67 = arith.addf %65, %66 : vector<8x256xf32>
    %c0_16 = arith.constant 0 : index
    %c0_17 = arith.constant 0 : index
    %c0_18 = arith.constant 0 : index
    %68 = vector.load %arg4[%c0_16, %c0_17, %c0_18] : memref<1x8x256xf32, #tpu.memory_space<vmem>>, vector<1x8x256xf32>
    %69 = vector.shape_cast %68 : vector<1x8x256xf32> to vector<8x256xf32>
    %70 = vector.shape_cast %67 : vector<8x256xf32> to vector<1x8x256xf32>
    tpu.vector_store %arg4[%c0_16, %c0_17, %c0_18], %70 {strides = array<i32>} : memref<1x8x256xf32, #tpu.memory_space<vmem>>, vector<1x8x256xf32>,
    return
  }
  func.func @transform_0(%arg0: i32) -> (i32, i32, i32, i32) {
    %c0_i32 = arith.constant 0 : i32
    %c0_i32_0 = arith.constant 0 : i32
    %c0_i32_1 = arith.constant 0 : i32
    %c0_i32_2 = arith.constant 0 : i32
    return %arg0, %c0_i32, %c0_i32_0, %c0_i32_1 : i32, i32, i32, i32
  }
  func.func @transform_1(%arg0: i32) -> (i32, i32, i32) {
    %c0_i32 = arith.constant 0 : i32
    %c0_i32_0 = arith.constant 0 : i32
    %c0_i32_1 = arith.constant 0 : i32
    %c0_i32_2 = arith.constant 0 : i32
    return %c0_i32, %c0_i32_0, %c0_i32_1 : i32, i32, i32
  }
  func.func @transform_2(%arg0: i32) -> (i32, i32) {
    %c0_i32 = arith.constant 0 : i32
    %c0_i32_0 = arith.constant 0 : i32
    %c0_i32_1 = arith.constant 0 : i32
    return %c0_i32, %c0_i32_0 : i32, i32
  }
  func.func @transform_3(%arg0: i32) -> (i32, i32, i32) {
    %c0_i32 = arith.constant 0 : i32
    %c0_i32_0 = arith.constant 0 : i32
    %c0_i32_1 = arith.constant 0 : i32
    return %arg0, %c0_i32, %c0_i32_0 : i32, i32, i32
  }
}

</mosaic_0001>

<llo_original>
// kernel: tpu_custom_call.1
$region0: #{tpu_custom_call.1}
  #allocation0 [shape = 'u32[]', space=smem, size = 0x4, offset = 0x4, fixed_abs, tag = 'smem constant byte address 0x4 - core index']
  #allocation1 [shape = 'u32[144,128]{1,0:T(1,128)}', space=vmem, size = 0x12000, scoped, tag = 'internal scratch']
  %s0 = inlined_call_operand.vmem [shape: f32[2,4,18,18], index: 0, kind: input, shape index: {}]
  %s1 = inlined_call_operand.vmem [shape: bf16[9,8,4], index: 1, kind: input, shape index: {}]
  %s2 = inlined_call_operand.vmem [shape: f32[8,1], index: 2, kind: input, shape index: {}]
  %s3 = inlined_call_operand.hbm [shape: f32[2,8,256], index: 3, kind: output, shape index: {}]
  %s4 = sld [smem:[#allocation0]]
  $region45: #{tpu_custom_call.1} parent=0
    _
  %s6 = ssub.s32 1, %s4
  %s7 = scalar_select 0, %s6, %s4
  $region1: #{tpu_custom_call.1} parent=0
    #allocation2 [shape = 'u8[16384]{0}', space=vmem, size = 0x4000, scoped, tag = 'output window, operand 0']
    #allocation3 [shape = 's32[2]{0}', space=sflag, size = 0x8, scoped, tag = 'scoped memory for tpu_custom_call.1']
    %8 = vsyncpa [#allocation3], 0
    %s9 = scalar_lea.sflag [#allocation3], 1
    %10 = vsyncpa %s9, 0
    loop: start=0, step=1, limit=4
    $region2: #{tpu_custom_call.1} parent=1 // loop_pre_header
      _
    $region3: #{tpu_custom_call.1} parent=1 // loop_header
      %s12 = sphi 0, %s16
      %p13 = scmp.ge.s32.totalorder %s12, 4
      %s22 = sphi 0, %s24
      %s25 = sphi 0, %s22
      %s26 = sphi 0, %s25
      %s42 = sphi 0, %s26
      %s46 = sphi 0, %s46
      %s48 = sphi 0, %s46
      %s49 = sphi 0, %s48
      %s63 = sphi 0, %s49
      %s67 = sphi 0, %s67
      %s69 = sphi 0, %s67
      %s70 = sphi 0, %s69
      %s84 = sphi 0, %s70
      %s90 = sphi 0, %s92
      %s93 = sphi 0, %s90
      %s94 = sphi 0, %s93
      %s110 = sphi 0, %s94
    $region4: #{tpu_custom_call.1} parent=1 // loop_header_branch
      %15 = sbr.rel (%p13) target = $region8
    $region5: #{tpu_custom_call.1} parent=1 // loop_body
      %s17 = ssub.s32 %s12, 1
      %s18 = ssub.s32 %s12, 2
      %s19 = sadd.s32 %s12, 1
      %s20 = ssub.s32 %s12, %s19
      %p21 = scmp.eq.s32.totalorder %s20, 0
      %s23 = sadd.s32 %s22, 1
      %s24 = scalar_select %p21, %s22, %s23
      %p27 = pneg %p21
      %p28 = scmp.eq.s32.totalorder %s12, 1
      %p29 = por %p27, %p28
      %p30 = scmp.ne.s32.totalorder %s22, %s25
      %p31 = scmp.eq.s32.totalorder %s12, 0
      %p32 = por %p30, %p31
      %p33 = scmp.ne.s32.totalorder %s22, %s25
      %p34 = scmp.eq.s32.totalorder %s17, 1
      %p35 = por %p33, %p34
      %p36 = scmp.ne.s32.totalorder %s25, %s26
      %p37 = scmp.eq.s32.totalorder %s17, 0
      %p38 = por %p36, %p37
      %p39 = scmp.ne.s32.totalorder %s25, %s26
      %p40 = scmp.eq.s32.totalorder %s18, 1
      %p41 = por %p39, %p40
      %p43 = scmp.ne.s32.totalorder %s26, %s42
      %p44 = scmp.eq.s32.totalorder %s18, 0
      %p45 = por %p43, %p44
      %s47 = sadd.s32 %s46, 1
      %p50 = scmp.eq.s32.totalorder %s12, 1
      %p51 = scmp.ne.s32.totalorder %s46, %s48
      %p52 = scmp.eq.s32.totalorder %s12, 0
      %p53 = por %p51, %p52
      %p54 = scmp.ne.s32.totalorder %s46, %s48
      %p55 = scmp.eq.s32.totalorder %s17, 1
      %p56 = por %p54, %p55
      %p57 = scmp.ne.s32.totalorder %s48, %s49
      %p58 = scmp.eq.s32.totalorder %s17, 0
      %p59 = por %p57, %p58
      %p60 = scmp.ne.s32.totalorder %s48, %s49
      %p61 = scmp.eq.s32.totalorder %s18, 1
      %p62 = por %p60, %p61
      %p64 = scmp.ne.s32.totalorder %s49, %s63
      %p65 = scmp.eq.s32.totalorder %s18, 0
      %p66 = por %p64, %p65
      %s68 = sadd.s32 %s67, 1
      %p71 = scmp.eq.s32.totalorder %s12, 1
      %p72 = scmp.ne.s32.totalorder %s67, %s69
      %p73 = scmp.eq.s32.totalorder %s12, 0
      %p74 = por %p72, %p73
      %p75 = scmp.ne.s32.totalorder %s67, %s69
      %p76 = scmp.eq.s32.totalorder %s17, 1
      %p77 = por %p75, %p76
      %p78 = scmp.ne.s32.totalorder %s69, %s70
      %p79 = scmp.eq.s32.totalorder %s17, 0
      %p80 = por %p78, %p79
      %p81 = scmp.ne.s32.totalorder %s69, %s70
      %p82 = scmp.eq.s32.totalorder %s18, 1
      %p83 = por %p81, %p82
      %p85 = scmp.ne.s32.totalorder %s70, %s84
      %p86 = scmp.eq.s32.totalorder %s18, 0
      %p87 = por %p85, %p86
      %s88 = ssub.s32 %s12, %s19
      %p89 = scmp.eq.s32.totalorder %s88, 0
      %s91 = sadd.s32 %s90, 1
      %s92 = scalar_select %p89, %s90, %s91
      %p95 = pneg %p89
      %p96 = scmp.eq.s32.totalorder %s12, 1
      %p97 = por %p95, %p96
      %p98 = scmp.ne.s32.totalorder %s90, %s93
      %p99 = scmp.eq.s32.totalorder %s12, 0
      %p100 = por %p98, %p99
      %p101 = scmp.ne.s32.totalorder %s90, %s93
      %p102 = scmp.eq.s32.totalorder %s17, 1
      %p103 = por %p101, %p102
      %p104 = scmp.ne.s32.totalorder %s93, %s94
      %p105 = scmp.eq.s32.totalorder %s17, 0
      %p106 = por %p104, %p105
      %p107 = scmp.ne.s32.totalorder %s93, %s94
      %p108 = scmp.eq.s32.totalorder %s18, 1
      %p109 = por %p107, %p108
      %p111 = scmp.ne.s32.totalorder %s94, %s110
      %p112 = scmp.eq.s32.totalorder %s18, 0
      %p113 = por %p111, %p112
      %p114 = scmp.le.s32.totalorder 1, %s12
      %p115 = scmp.lt.s32.totalorder %s12, 3
      %p116 = pnand %p114, %p115
      %p117 = pneg %p116
      // Predicated region
      $region9: #{tpu_custom_call.1} parent=5 // pred_check
        _
      $region10: #{tpu_custom_call.1} parent=5 // pred_check_branch
        %119 = sbr.rel (%p116) target = $region12
      $region11: #{tpu_custom_call.1} parent=5 // pred_region
        %s120 = ssub.s32 %s12, 1
        // Predicated region
        $region13: #{tpu_custom_call.1} parent=11 // pred_check
          %p121 = pneg %p59
        $region14: #{tpu_custom_call.1} parent=11 // pred_check_branch
          %123 = sbr.rel (%p121) target = $region16
        $region15: #{tpu_custom_call.1} parent=11 // pred_region
          _
        $region16: #{tpu_custom_call.1} parent=11 // pred_fallthru
          _
        // Predicated region
        $region17: #{tpu_custom_call.1} parent=11 // pred_check
          %p124 = pneg %p80
        $region18: #{tpu_custom_call.1} parent=11 // pred_check_branch
          %126 = sbr.rel (%p124) target = $region20
        $region19: #{tpu_custom_call.1} parent=11 // pred_region
          _
        $region20: #{tpu_custom_call.1} parent=11 // pred_fallthru
          _
      $region12: #{tpu_custom_call.1} parent=5 // pred_fallthru
        _
      %p127 = scmp.lt.s32.totalorder %s12, 2
      // Predicated region
      $region21: #{tpu_custom_call.1} parent=5 // pred_check
        %p128 = pneg %p127
      $region22: #{tpu_custom_call.1} parent=5 // pred_check_branch
        %130 = sbr.rel (%p128) target = $region24
      $region23: #{tpu_custom_call.1} parent=5 // pred_region
        // Predicated region
        $region25: #{tpu_custom_call.1} parent=23 // pred_check
          %p131 = pneg %p32
        $region26: #{tpu_custom_call.1} parent=23 // pred_check_branch
          %133 = sbr.rel (%p131) target = $region28
        $region27: #{tpu_custom_call.1} parent=23 // pred_region
          %p134 = scmp.lt.s32.totalorder %s12, 1
          %s135 = scalar_select %p134, %s12, 1
          %s136 = smul.addr %s135, 12
          %s137 = smul.addr %s136, 8
          %s138 = scalar_lea.vmem %s0, %s137
        $region28: #{tpu_custom_call.1} parent=23 // pred_fallthru
          _
      $region24: #{tpu_custom_call.1} parent=5 // pred_fallthru
        _
      %p139 = scmp.le.s32.totalorder 1, %s12
      %p140 = scmp.lt.s32.totalorder %s12, 3
      %p141 = pnand %p139, %p140
      %p142 = pneg %p141
      // Predicated region
      $region29: #{tpu_custom_call.1} parent=5 // pred_check
        _
      $region30: #{tpu_custom_call.1} parent=5 // pred_check_branch
        %144 = sbr.rel (%p141) target = $region32
      $region31: #{tpu_custom_call.1} parent=5 // pred_region
        %s145 = ssub.s32 %s12, 1
        %p146 = scmp.lt.s32.totalorder %s17, 1
        %s147 = scalar_select %p146, %s17, 1
        %s148 = smul.addr %s147, 12
        %s149 = smul.addr %s148, 8
        %s150 = scalar_lea.vmem %s0, %s149
        %p151 = pneg %p38
        %p152 = pneg %p35
        %p153 = pneg %p59
        %p154 = pneg %p56
        %p155 = pneg %p80
        %p156 = pneg %p77
        %p157 = pneg %p106
        %p158 = pneg %p103
        %s159 = sand.u32 %s93, 1
        %s160 = scalar_lea.sflag [#allocation3], %s159
        %s161 = sand.u32 %s93, 1
        %s162 = smul.addr %s161, 16
        %s163 = scalar_lea.vmem [#allocation2], %s162
        %p164 = scmp.lt.s32.totalorder %s17, 1
        %s165 = scalar_select %p164, %s17, 1
        %s166 = smul.addr %s165, 12
        %s167 = smul.addr %s166, 8
        %s168 = scalar_lea.vmem %s0, %s167
        %v170 = vld [vmem:[%s1] sm:$0xf]
        %v171 = vld [vmem:[%s1 + $0x4] sm:$0xf]
        %v172 = vld [vmem:[%s1 + $0x8] sm:$0xf]
        %v173 = vld [vmem:[%s1 + $0xc] sm:$0xf]
        %v174 = vld [vmem:[%s1 + $0x10] sm:$0xf]
        %v175 = vld [vmem:[%s1 + $0x14] sm:$0xf]
        %v176 = vld [vmem:[%s1 + $0x18] sm:$0xf]
        %v177 = vld [vmem:[%s1 + $0x1c] sm:$0xf]
        %v178 = vld [vmem:[%s1 + $0x20] sm:$0xf]
        %v179 = vld [vmem:[%s2] sm:$0xff]
        %v180 = vld [vmem:[%s168] sm:$0xff]
        %v181 = vld [vmem:[%s168 + $0x8] sm:$0xff]
        %v182 = vld [vmem:[%s168 + $0x10] sm:$0x3]
        %v183 = vld [vmem:[%s168 + $0x18] sm:$0xff]
        %v184 = vld [vmem:[%s168 + $0x20] sm:$0xff]
        %v185 = vld [vmem:[%s168 + $0x28] sm:$0x3]
        %v186 = vld [vmem:[%s168 + $0x30] sm:$0xff]
        %v187 = vld [vmem:[%s168 + $0x38] sm:$0xff]
        %v188 = vld [vmem:[%s168 + $0x40] sm:$0x3]
        %v189 = vld [vmem:[%s168 + $0x48] sm:$0xff]
        %v190 = vld [vmem:[%s168 + $0x50] sm:$0xff]
        %v191 = vld [vmem:[%s168 + $0x58] sm:$0x3]
        %v192 = vcombine.low %v180, %v186
        %v193 = vcombine.high %v180, %v186
        %v195 = vunpack.c.l.s4 1983009808
        %v196 = vunpack.c.0.s8 %v195
        %v197 = vlaneseq
        %v198 = vshrl.u32 %v197, 7
        %v199 = vsub.s32 %v196, %v198
        %v200 = vrot.slane %v192, %v199
        %v202 = vunpack.c.l.s4 1983009808
        %v203 = vunpack.c.0.s8 %v202
        %v204 = vlaneseq
        %v205 = vshrl.u32 %v204, 7
        %v206 = vsub.s32 %v203, %v205
        %v207 = vrot.slane %v193, %v206
        %v208 = vcombine.low %v183, %v189
        %v209 = vcombine.high %v183, %v189
        %v211 = vunpack.c.l.s4 1983009808
        %v212 = vunpack.c.0.s8 %v211
        %v213 = vlaneseq
        %v214 = vshrl.u32 %v213, 7
        %v215 = vsub.s32 %v212, %v214
        %v216 = vrot.slane %v208, %v215
        %v218 = vunpack.c.l.s4 1983009808
        %v219 = vunpack.c.0.s8 %v218
        %v220 = vlaneseq
        %v221 = vshrl.u32 %v220, 7
        %v222 = vsub.s32 %v219, %v221
        %v223 = vrot.slane %v209, %v222
        %v224 = vcombine.low %v200, %v216
        %v225 = vcombine.high %v200, %v216
        %v227 = vunpack.c.l.s4 1934713408
        %v228 = vunpack.c.0.s8 %v227
        %v229 = vlaneseq
        %v230 = vshrl.u32 %v229, 7
        %v231 = vsub.s32 %v228, %v230
        %v232 = vrot.slane %v224, %v231
        %v234 = vunpack.c.l.s4 1934713408
        %v235 = vunpack.c.0.s8 %v234
        %v236 = vlaneseq
        %v237 = vshrl.u32 %v236, 7
        %v238 = vsub.s32 %v235, %v237
        %v239 = vrot.slane %v225, %v238
        %v240 = vcombine.low %v207, %v223
        %v241 = vcombine.high %v207, %v223
        %v243 = vunpack.c.l.s4 1934713408
        %v244 = vunpack.c.0.s8 %v243
        %v245 = vlaneseq
        %v246 = vshrl.u32 %v245, 7
        %v247 = vsub.s32 %v244, %v246
        %v248 = vrot.slane %v240, %v247
        %v250 = vunpack.c.l.s4 1934713408
        %v251 = vunpack.c.0.s8 %v250
        %v252 = vlaneseq
        %v253 = vshrl.u32 %v252, 7
        %v254 = vsub.s32 %v251, %v253
        %v255 = vrot.slane %v241, %v254
        %v256 = vcombine.high %v232, 0.0
        %v257 = vcombine.high %v239, 0.0
        %v258 = vcombine.high %v248, 0.0
        %v259 = vcombine.high %v255, 0.0
        %v260 = vcombine.low %v181, %v187
        %v261 = vcombine.high %v181, %v187
        %v263 = vunpack.c.l.s4 1983009808
        %v264 = vunpack.c.0.s8 %v263
        %v265 = vlaneseq
        %v266 = vshrl.u32 %v265, 7
        %v267 = vsub.s32 %v264, %v266
        %v268 = vrot.slane %v260, %v267
        %v270 = vunpack.c.l.s4 1983009808
        %v271 = vunpack.c.0.s8 %v270
        %v272 = vlaneseq
        %v273 = vshrl.u32 %v272, 7
        %v274 = vsub.s32 %v271, %v273
        %v275 = vrot.slane %v261, %v274
        %v276 = vcombine.low %v184, %v190
        %v277 = vcombine.high %v184, %v190
        %v279 = vunpack.c.l.s4 1983009808
        %v280 = vunpack.c.0.s8 %v279
        %v281 = vlaneseq
        %v282 = vshrl.u32 %v281, 7
        %v283 = vsub.s32 %v280, %v282
        %v284 = vrot.slane %v276, %v283
        %v286 = vunpack.c.l.s4 1983009808
        %v287 = vunpack.c.0.s8 %v286
        %v288 = vlaneseq
        %v289 = vshrl.u32 %v288, 7
        %v290 = vsub.s32 %v287, %v289
        %v291 = vrot.slane %v277, %v290
        %v292 = vcombine.low %v268, %v284
        %v293 = vcombine.high %v268, %v284
        %v295 = vunpack.c.l.s4 1934713408
        %v296 = vunpack.c.0.s8 %v295
        %v297 = vlaneseq
        %v298 = vshrl.u32 %v297, 7
        %v299 = vsub.s32 %v296, %v298
        %v300 = vrot.slane %v292, %v299
        %v302 = vunpack.c.l.s4 1934713408
        %v303 = vunpack.c.0.s8 %v302
        %v304 = vlaneseq
        %v305 = vshrl.u32 %v304, 7
        %v306 = vsub.s32 %v303, %v305
        %v307 = vrot.slane %v293, %v306
        %v308 = vcombine.low %v275, %v291
        %v309 = vcombine.high %v275, %v291
        %v311 = vunpack.c.l.s4 1934713408
        %v312 = vunpack.c.0.s8 %v311
        %v313 = vlaneseq
        %v314 = vshrl.u32 %v313, 7
        %v315 = vsub.s32 %v312, %v314
        %v316 = vrot.slane %v308, %v315
        %v318 = vunpack.c.l.s4 1934713408
        %v319 = vunpack.c.0.s8 %v318
        %v320 = vlaneseq
        %v321 = vshrl.u32 %v320, 7
        %v322 = vsub.s32 %v319, %v321
        %v323 = vrot.slane %v309, %v322
        %v324 = vcombine.high %v300, 0.0
        %v325 = vcombine.high %v307, 0.0
        %v326 = vcombine.high %v316, 0.0
        %v327 = vcombine.high %v323, 0.0
        %329 = vrot.lane.b32.xlu0 %v256, 16
        %v330 = vpop.permute.xlu0 %329
        %333 = vrot.lane.b32.xlu0 %v239, 32
        %v334 = vpop.permute.xlu0 %333
        %337 = vrot.lane.b32.xlu0 %v257, 48
        %v338 = vpop.permute.xlu0 %337
        %341 = vrot.lane.b32.xlu0 %v248, 64
        %v342 = vpop.permute.xlu0 %341
        %345 = vrot.lane.b32.xlu0 %v258, 80
        %v346 = vpop.permute.xlu0 %345
        %349 = vrot.lane.b32.xlu0 %v255, 96
        %v350 = vpop.permute.xlu0 %349
        %353 = vrot.lane.b32.xlu0 %v259, 112
        %v354 = vpop.permute.xlu0 %353
        %357 = vrot.lane.b32.xlu0 %v324, 16
        %v358 = vpop.permute.xlu0 %357
        %361 = vrot.lane.b32.xlu0 %v307, 32
        %v362 = vpop.permute.xlu0 %361
        %365 = vrot.lane.b32.xlu0 %v325, 48
        %v366 = vpop.permute.xlu0 %365
        %369 = vrot.lane.b32.xlu0 %v316, 64
        %v370 = vpop.permute.xlu0 %369
        %373 = vrot.lane.b32.xlu0 %v326, 80
        %v374 = vpop.permute.xlu0 %373
        %377 = vrot.lane.b32.xlu0 %v323, 96
        %v378 = vpop.permute.xlu0 %377
        %381 = vrot.lane.b32.xlu0 %v327, 112
        %v382 = vpop.permute.xlu0 %381
        %vm384 = vcmask 130048
        %v385 = vsel %vm384, %v232, %v330
        %vm386 = vcmask 261120
        %v387 = vsel %vm386, %v385, %v334
        %vm388 = vcmask 392192
        %v389 = vsel %vm388, %v387, %v338
        %vm390 = vcmask 523264
        %v391 = vsel %vm390, %v389, %v342
        %vm392 = vcmask 654336
        %v393 = vsel %vm392, %v391, %v346
        %vm394 = vcmask 785408
        %v395 = vsel %vm394, %v393, %v350
        %vm396 = vcmask 916480
        %v397 = vsel %vm396, %v395, %v354
        %v398 = vsel %vm384, %v300, %v358
        %v399 = vsel %vm386, %v398, %v362
        %v400 = vsel %vm388, %v399, %v366
        %v401 = vsel %vm390, %v400, %v370
        %v402 = vsel %vm392, %v401, %v374
        %v403 = vsel %vm394, %v402, %v378
        %v404 = vsel %vm396, %v403, %v382
        %v405 = vpack.c.bf16 %v397, %v397
        %v406 = vpack.c.bf16 %v404, %v404
        %415 = vrot.lane.b32.xlu0 %v180, 127
        %v416 = vpop.permute.xlu0 %415
        %417 = vrot.lane.b32.xlu0 %v181, 127
        %v418 = vpop.permute.xlu0 %417
        %419 = vrot.lane.b32.xlu0 %v183, 127
        %v420 = vpop.permute.xlu0 %419
        %421 = vrot.lane.b32.xlu0 %v184, 127
        %v422 = vpop.permute.xlu0 %421
        %423 = vrot.lane.b32.xlu0 %v186, 127
        %v424 = vpop.permute.xlu0 %423
        %425 = vrot.lane.b32.xlu0 %v187, 127
        %v426 = vpop.permute.xlu0 %425
        %427 = vrot.lane.b32.xlu0 %v189, 127
        %v428 = vpop.permute.xlu0 %427
        %429 = vrot.lane.b32.xlu0 %v190, 127
        %v430 = vpop.permute.xlu0 %429
        %v439 = vcombine.low %v416, %v424
        %v440 = vcombine.high %v416, %v424
        %v442 = vunpack.c.l.s4 1983009808
        %v443 = vunpack.c.0.s8 %v442
        %v444 = vlaneseq
        %v445 = vshrl.u32 %v444, 7
        %v446 = vsub.s32 %v443, %v445
        %v447 = vrot.slane %v439, %v446
        %v449 = vunpack.c.l.s4 1983009808
        %v450 = vunpack.c.0.s8 %v449
        %v451 = vlaneseq
        %v452 = vshrl.u32 %v451, 7
        %v453 = vsub.s32 %v450, %v452
        %v454 = vrot.slane %v440, %v453
        %v455 = vcombine.low %v420, %v428
        %v456 = vcombine.high %v420, %v428
        %v458 = vunpack.c.l.s4 1983009808
        %v459 = vunpack.c.0.s8 %v458
        %v460 = vlaneseq
        %v461 = vshrl.u32 %v460, 7
        %v462 = vsub.s32 %v459, %v461
        %v463 = vrot.slane %v455, %v462
        %v465 = vunpack.c.l.s4 1983009808
        %v466 = vunpack.c.0.s8 %v465
        %v467 = vlaneseq
        %v468 = vshrl.u32 %v467, 7
        %v469 = vsub.s32 %v466, %v468
        %v470 = vrot.slane %v456, %v469
        %v471 = vcombine.low %v447, %v463
        %v472 = vcombine.high %v447, %v463
        %v474 = vunpack.c.l.s4 1934713408
        %v475 = vunpack.c.0.s8 %v474
        %v476 = vlaneseq
        %v477 = vshrl.u32 %v476, 7
        %v478 = vsub.s32 %v475, %v477
        %v479 = vrot.slane %v471, %v478
        %v481 = vunpack.c.l.s4 1934713408
        %v482 = vunpack.c.0.s8 %v481
        %v483 = vlaneseq
        %v484 = vshrl.u32 %v483, 7
        %v485 = vsub.s32 %v482, %v484
        %v486 = vrot.slane %v472, %v485
        %v487 = vcombine.low %v454, %v470
        %v488 = vcombine.high %v454, %v470
        %v490 = vunpack.c.l.s4 1934713408
        %v491 = vunpack.c.0.s8 %v490
        %v492 = vlaneseq
        %v493 = vshrl.u32 %v492, 7
        %v494 = vsub.s32 %v491, %v493
        %v495 = vrot.slane %v487, %v494
        %v497 = vunpack.c.l.s4 1934713408
        %v498 = vunpack.c.0.s8 %v497
        %v499 = vlaneseq
        %v500 = vshrl.u32 %v499, 7
        %v501 = vsub.s32 %v498, %v500
        %v502 = vrot.slane %v488, %v501
        %v503 = vcombine.high %v479, 0.0
        %v504 = vcombine.high %v486, 0.0
        %v505 = vcombine.high %v495, 0.0
        %v506 = vcombine.high %v502, 0.0
        %v507 = vcombine.low %v418, %v426
        %v508 = vcombine.high %v418, %v426
        %v510 = vunpack.c.l.s4 1983009808
        %v511 = vunpack.c.0.s8 %v510
        %v512 = vlaneseq
        %v513 = vshrl.u32 %v512, 7
        %v514 = vsub.s32 %v511, %v513
        %v515 = vrot.slane %v507, %v514
        %v517 = vunpack.c.l.s4 1983009808
        %v518 = vunpack.c.0.s8 %v517
        %v519 = vlaneseq
        %v520 = vshrl.u32 %v519, 7
        %v521 = vsub.s32 %v518, %v520
        %v522 = vrot.slane %v508, %v521
        %v523 = vcombine.low %v422, %v430
        %v524 = vcombine.high %v422, %v430
        %v526 = vunpack.c.l.s4 1983009808
        %v527 = vunpack.c.0.s8 %v526
        %v528 = vlaneseq
        %v529 = vshrl.u32 %v528, 7
        %v530 = vsub.s32 %v527, %v529
        %v531 = vrot.slane %v523, %v530
        %v533 = vunpack.c.l.s4 1983009808
        %v534 = vunpack.c.0.s8 %v533
        %v535 = vlaneseq
        %v536 = vshrl.u32 %v535, 7
        %v537 = vsub.s32 %v534, %v536
        %v538 = vrot.slane %v524, %v537
        %v539 = vcombine.low %v515, %v531
        %v540 = vcombine.high %v515, %v531
        %v542 = vunpack.c.l.s4 1934713408
        %v543 = vunpack.c.0.s8 %v542
        %v544 = vlaneseq
        %v545 = vshrl.u32 %v544, 7
        %v546 = vsub.s32 %v543, %v545
        %v547 = vrot.slane %v539, %v546
        %v549 = vunpack.c.l.s4 1934713408
        %v550 = vunpack.c.0.s8 %v549
        %v551 = vlaneseq
        %v552 = vshrl.u32 %v551, 7
        %v553 = vsub.s32 %v550, %v552
        %v554 = vrot.slane %v540, %v553
        %v555 = vcombine.low %v522, %v538
        %v556 = vcombine.high %v522, %v538
        %v558 = vunpack.c.l.s4 1934713408
        %v559 = vunpack.c.0.s8 %v558
        %v560 = vlaneseq
        %v561 = vshrl.u32 %v560, 7
        %v562 = vsub.s32 %v559, %v561
        %v563 = vrot.slane %v555, %v562
        %v565 = vunpack.c.l.s4 1934713408
        %v566 = vunpack.c.0.s8 %v565
        %v567 = vlaneseq
        %v568 = vshrl.u32 %v567, 7
        %v569 = vsub.s32 %v566, %v568
        %v570 = vrot.slane %v556, %v569
        %v571 = vcombine.high %v547, 0.0
        %v572 = vcombine.high %v554, 0.0
        %v573 = vcombine.high %v563, 0.0
        %v574 = vcombine.high %v570, 0.0
        %576 = vrot.lane.b32.xlu0 %v503, 16
        %v577 = vpop.permute.xlu0 %576
        %580 = vrot.lane.b32.xlu0 %v486, 32
        %v581 = vpop.permute.xlu0 %580
        %584 = vrot.lane.b32.xlu0 %v504, 48
        %v585 = vpop.permute.xlu0 %584
        %588 = vrot.lane.b32.xlu0 %v495, 64
        %v589 = vpop.permute.xlu0 %588
        %592 = vrot.lane.b32.xlu0 %v505, 80
        %v593 = vpop.permute.xlu0 %592
        %596 = vrot.lane.b32.xlu0 %v502, 96
        %v597 = vpop.permute.xlu0 %596
        %600 = vrot.lane.b32.xlu0 %v506, 112
        %v601 = vpop.permute.xlu0 %600
        %604 = vrot.lane.b32.xlu0 %v571, 16
        %v605 = vpop.permute.xlu0 %604
        %608 = vrot.lane.b32.xlu0 %v554, 32
        %v609 = vpop.permute.xlu0 %608
        %612 = vrot.lane.b32.xlu0 %v572, 48
        %v613 = vpop.permute.xlu0 %612
        %616 = vrot.lane.b32.xlu0 %v563, 64
        %v617 = vpop.permute.xlu0 %616
        %620 = vrot.lane.b32.xlu0 %v573, 80
        %v621 = vpop.permute.xlu0 %620
        %624 = vrot.lane.b32.xlu0 %v570, 96
        %v625 = vpop.permute.xlu0 %624
        %628 = vrot.lane.b32.xlu0 %v574, 112
        %v629 = vpop.permute.xlu0 %628
        %v631 = vsel %vm384, %v479, %v577
        %v632 = vsel %vm386, %v631, %v581
        %v633 = vsel %vm388, %v632, %v585
        %v634 = vsel %vm390, %v633, %v589
        %v635 = vsel %vm392, %v634, %v593
        %v636 = vsel %vm394, %v635, %v597
        %v637 = vsel %vm396, %v636, %v601
        %v638 = vsel %vm384, %v547, %v605
        %v639 = vsel %vm386, %v638, %v609
        %v640 = vsel %vm388, %v639, %v613
        %v641 = vsel %vm390, %v640, %v617
        %v642 = vsel %vm392, %v641, %v621
        %v643 = vsel %vm394, %v642, %v625
        %v644 = vsel %vm396, %v643, %v629
        %v645 = vpack.c.bf16 %v637, %v637
        %v646 = vpack.c.bf16 %v644, %v644
        %vm647 = vcmask 31744
        %v649 = vsel %vm647, %v171, 0
        %vm651 = vcmask 1041408
        %v653 = vsel %vm651, %v645, 0
        %v656 = vsel %vm651, %v646, 0
        %658 = vmatprep.subr.bf16.mxu0 %v656
        %659 = vmatpush1.bf16.msra.mxu0 %v653
        %660 = vmatprep.subr.bf16.mxu0 0
        %661 = vmatpush1.bf16.msra.mxu0 0
        %662 = vmatprep.subr.bf16.mxu0 0
        %663 = vmatpush1.bf16.msra.mxu0 0
        %664 = vmatprep.subr.bf16.mxu0 0
        %665 = vmatpush1.bf16.msra.mxu0 0
        %666 = vmatprep.subr.bf16.mxu0 0
        %667 = vmatpush1.bf16.msra.mxu0 0
        %668 = vmatprep.subr.bf16.mxu0 0
        %669 = vmatpush1.bf16.msra.mxu0 0
        %670 = vmatprep.subr.bf16.mxu0 0
        %671 = vmatpush1.bf16.msra.mxu0 0
        %672 = vmatprep.subr.bf16.mxu0 0
        %673 = vmatpush1.bf16.msra.mxu0 0
        %674 = vmatprep.subr.bf16.mxu0 0
        %675 = vmatpush1.bf16.msra.mxu0 0
        %676 = vmatprep.subr.bf16.mxu0 0
        %677 = vmatpush1.bf16.msra.mxu0 0
        %678 = vmatprep.subr.bf16.mxu0 0
        %679 = vmatpush1.bf16.msra.mxu0 0
        %680 = vmatprep.subr.bf16.mxu0 0
        %681 = vmatpush1.bf16.msra.mxu0 0
        %682 = vmatprep.subr.bf16.mxu0 0
        %683 = vmatpush1.bf16.msra.mxu0 0
        %684 = vmatprep.subr.bf16.mxu0 0
        %685 = vmatpush1.bf16.msra.mxu0 0
        %686 = vmatprep.subr.bf16.mxu0 0
        %687 = vmatpush1.bf16.msra.mxu0 0
        %688 = vmatprep.subr.bf16.mxu0 0
        %689 = vmatpush1.bf16.msra.mxu0 0
        %690 = vmatprep.mubr.bf16.mxu0 0
        %691 = vmatmul.mubr.bf16.gmra.mrb[0].mxu0 %v649
        %v692 = vpop.f32.mrb[0].mxu0
        %v693 = vadd.f32 0.0, %v692
        %v694 = vpop.f32.mrb[0].mxu0
        %v695 = vadd.f32 0.0, %v694
        %v696 = vpop.f32.mrb[0].mxu0
        %v697 = vpop.f32.mrb[0].mxu0
        %698 = vdwg.mxu0
        %v700 = vsel %vm647, %v170, 0
        %v703 = vsel %vm651, %v405, 0
        %v706 = vsel %vm651, %v406, 0
        %708 = vmatprep.subr.bf16.mxu0 %v706
        %709 = vmatpush1.bf16.msra.mxu0 %v703
        %710 = vmatprep.subr.bf16.mxu0 0
        %711 = vmatpush1.bf16.msra.mxu0 0
        %712 = vmatprep.subr.bf16.mxu0 0
        %713 = vmatpush1.bf16.msra.mxu0 0
        %714 = vmatprep.subr.bf16.mxu0 0
        %715 = vmatpush1.bf16.msra.mxu0 0
        %716 = vmatprep.subr.bf16.mxu0 0
        %717 = vmatpush1.bf16.msra.mxu0 0
        %718 = vmatprep.subr.bf16.mxu0 0
        %719 = vmatpush1.bf16.msra.mxu0 0
        %720 = vmatprep.subr.bf16.mxu0 0
        %721 = vmatpush1.bf16.msra.mxu0 0
        %722 = vmatprep.subr.bf16.mxu0 0
        %723 = vmatpush1.bf16.msra.mxu0 0
        %724 = vmatprep.subr.bf16.mxu0 0
        %725 = vmatpush1.bf16.msra.mxu0 0
        %726 = vmatprep.subr.bf16.mxu0 0
        %727 = vmatpush1.bf16.msra.mxu0 0
        %728 = vmatprep.subr.bf16.mxu0 0
        %729 = vmatpush1.bf16.msra.mxu0 0
        %730 = vmatprep.subr.bf16.mxu0 0
        %731 = vmatpush1.bf16.msra.mxu0 0
        %732 = vmatprep.subr.bf16.mxu0 0
        %733 = vmatpush1.bf16.msra.mxu0 0
        %734 = vmatprep.subr.bf16.mxu0 0
        %735 = vmatpush1.bf16.msra.mxu0 0
        %736 = vmatprep.subr.bf16.mxu0 0
        %737 = vmatpush1.bf16.msra.mxu0 0
        %738 = vmatprep.subr.bf16.mxu0 0
        %739 = vmatpush1.bf16.msra.mxu0 0
        %740 = vmatprep.mubr.bf16.mxu0 0
        %741 = vmatmul.mubr.bf16.gmra.mrb[0].mxu0 %v700
        %v742 = vpop.f32.mrb[0].mxu0
        %v743 = vadd.f32 %v693, %v742
        %v744 = vpop.f32.mrb[0].mxu0
        %v745 = vadd.f32 %v695, %v744
        %v746 = vpop.f32.mrb[0].mxu0
        %v747 = vpop.f32.mrb[0].mxu0
        %748 = vdwg.mxu0
        %749 = vrot.lane.b32.xlu0 %v180, 126
        %v750 = vpop.permute.xlu0 %749
        %751 = vrot.lane.b32.xlu0 %v181, 126
        %v752 = vpop.permute.xlu0 %751
        %753 = vrot.lane.b32.xlu0 %v183, 126
        %v754 = vpop.permute.xlu0 %753
        %755 = vrot.lane.b32.xlu0 %v184, 126
        %v756 = vpop.permute.xlu0 %755
        %757 = vrot.lane.b32.xlu0 %v186, 126
        %v758 = vpop.permute.xlu0 %757
        %759 = vrot.lane.b32.xlu0 %v187, 126
        %v760 = vpop.permute.xlu0 %759
        %761 = vrot.lane.b32.xlu0 %v189, 126
        %v762 = vpop.permute.xlu0 %761
        %763 = vrot.lane.b32.xlu0 %v190, 126
        %v764 = vpop.permute.xlu0 %763
        %v773 = vcombine.low %v750, %v758
        %v774 = vcombine.high %v750, %v758
        %v776 = vunpack.c.l.s4 1983009808
        %v777 = vunpack.c.0.s8 %v776
        %v778 = vlaneseq
        %v779 = vshrl.u32 %v778, 7
        %v780 = vsub.s32 %v777, %v779
        %v781 = vrot.slane %v773, %v780
        %v783 = vunpack.c.l.s4 1983009808
        %v784 = vunpack.c.0.s8 %v783
        %v785 = vlaneseq
        %v786 = vshrl.u32 %v785, 7
        %v787 = vsub.s32 %v784, %v786
        %v788 = vrot.slane %v774, %v787
        %v789 = vcombine.low %v754, %v762
        %v790 = vcombine.high %v754, %v762
        %v792 = vunpack.c.l.s4 1983009808
        %v793 = vunpack.c.0.s8 %v792
        %v794 = vlaneseq
        %v795 = vshrl.u32 %v794, 7
        %v796 = vsub.s32 %v793, %v795
        %v797 = vrot.slane %v789, %v796
        %v799 = vunpack.c.l.s4 1983009808
        %v800 = vunpack.c.0.s8 %v799
        %v801 = vlaneseq
        %v802 = vshrl.u32 %v801, 7
        %v803 = vsub.s32 %v800, %v802
        %v804 = vrot.slane %v790, %v803
        %v805 = vcombine.low %v781, %v797
        %v806 = vcombine.high %v781, %v797
        %v808 = vunpack.c.l.s4 1934713408
        %v809 = vunpack.c.0.s8 %v808
        %v810 = vlaneseq
        %v811 = vshrl.u32 %v810, 7
        %v812 = vsub.s32 %v809, %v811
        %v813 = vrot.slane %v805, %v812
        %v815 = vunpack.c.l.s4 1934713408
        %v816 = vunpack.c.0.s8 %v815
        %v817 = vlaneseq
        %v818 = vshrl.u32 %v817, 7
        %v819 = vsub.s32 %v816, %v818
        %v820 = vrot.slane %v806, %v819
        %v821 = vcombine.low %v788, %v804
        %v822 = vcombine.high %v788, %v804
        %v824 = vunpack.c.l.s4 1934713408
        %v825 = vunpack.c.0.s8 %v824
        %v826 = vlaneseq
        %v827 = vshrl.u32 %v826, 7
        %v828 = vsub.s32 %v825, %v827
        %v829 = vrot.slane %v821, %v828
        %v831 = vunpack.c.l.s4 1934713408
        %v832 = vunpack.c.0.s8 %v831
        %v833 = vlaneseq
        %v834 = vshrl.u32 %v833, 7
        %v835 = vsub.s32 %v832, %v834
        %v836 = vrot.slane %v822, %v835
        %v837 = vcombine.high %v813, 0.0
        %v838 = vcombine.high %v820, 0.0
        %v839 = vcombine.high %v829, 0.0
        %v840 = vcombine.high %v836, 0.0
        %v841 = vcombine.low %v752, %v760
        %v842 = vcombine.high %v752, %v760
        %v844 = vunpack.c.l.s4 1983009808
        %v845 = vunpack.c.0.s8 %v844
        %v846 = vlaneseq
        %v847 = vshrl.u32 %v846, 7
        %v848 = vsub.s32 %v845, %v847
        %v849 = vrot.slane %v841, %v848
        %v851 = vunpack.c.l.s4 1983009808
        %v852 = vunpack.c.0.s8 %v851
        %v853 = vlaneseq
        %v854 = vshrl.u32 %v853, 7
        %v855 = vsub.s32 %v852, %v854
        %v856 = vrot.slane %v842, %v855
        %v857 = vcombine.low %v756, %v764
        %v858 = vcombine.high %v756, %v764
        %v860 = vunpack.c.l.s4 1983009808
        %v861 = vunpack.c.0.s8 %v860
        %v862 = vlaneseq
        %v863 = vshrl.u32 %v862, 7
        %v864 = vsub.s32 %v861, %v863
        %v865 = vrot.slane %v857, %v864
        %v867 = vunpack.c.l.s4 1983009808
        %v868 = vunpack.c.0.s8 %v867
        %v869 = vlaneseq
        %v870 = vshrl.u32 %v869, 7
        %v871 = vsub.s32 %v868, %v870
        %v872 = vrot.slane %v858, %v871
        %v873 = vcombine.low %v849, %v865
        %v874 = vcombine.high %v849, %v865
        %v876 = vunpack.c.l.s4 1934713408
        %v877 = vunpack.c.0.s8 %v876
        %v878 = vlaneseq
        %v879 = vshrl.u32 %v878, 7
        %v880 = vsub.s32 %v877, %v879
        %v881 = vrot.slane %v873, %v880
        %v883 = vunpack.c.l.s4 1934713408
        %v884 = vunpack.c.0.s8 %v883
        %v885 = vlaneseq
        %v886 = vshrl.u32 %v885, 7
        %v887 = vsub.s32 %v884, %v886
        %v888 = vrot.slane %v874, %v887
        %v889 = vcombine.low %v856, %v872
        %v890 = vcombine.high %v856, %v872
        %v892 = vunpack.c.l.s4 1934713408
        %v893 = vunpack.c.0.s8 %v892
        %v894 = vlaneseq
        %v895 = vshrl.u32 %v894, 7
        %v896 = vsub.s32 %v893, %v895
        %v897 = vrot.slane %v889, %v896
        %v899 = vunpack.c.l.s4 1934713408
        %v900 = vunpack.c.0.s8 %v899
        %v901 = vlaneseq
        %v902 = vshrl.u32 %v901, 7
        %v903 = vsub.s32 %v900, %v902
        %v904 = vrot.slane %v890, %v903
        %v905 = vcombine.high %v881, 0.0
        %v906 = vcombine.high %v888, 0.0
        %v907 = vcombine.high %v897, 0.0
        %v908 = vcombine.high %v904, 0.0
        %910 = vrot.lane.b32.xlu0 %v837, 16
        %v911 = vpop.permute.xlu0 %910
        %914 = vrot.lane.b32.xlu0 %v820, 32
        %v915 = vpop.permute.xlu0 %914
        %918 = vrot.lane.b32.xlu0 %v838, 48
        %v919 = vpop.permute.xlu0 %918
        %922 = vrot.lane.b32.xlu0 %v829, 64
        %v923 = vpop.permute.xlu0 %922
        %926 = vrot.lane.b32.xlu0 %v839, 80
        %v927 = vpop.permute.xlu0 %926
        %930 = vrot.lane.b32.xlu0 %v836, 96
        %v931 = vpop.permute.xlu0 %930
        %934 = vrot.lane.b32.xlu0 %v840, 112
        %v935 = vpop.permute.xlu0 %934
        %938 = vrot.lane.b32.xlu0 %v905, 16
        %v939 = vpop.permute.xlu0 %938
        %942 = vrot.lane.b32.xlu0 %v888, 32
        %v943 = vpop.permute.xlu0 %942
        %946 = vrot.lane.b32.xlu0 %v906, 48
        %v947 = vpop.permute.xlu0 %946
        %950 = vrot.lane.b32.xlu0 %v897, 64
        %v951 = vpop.permute.xlu0 %950
        %954 = vrot.lane.b32.xlu0 %v907, 80
        %v955 = vpop.permute.xlu0 %954
        %958 = vrot.lane.b32.xlu0 %v904, 96
        %v959 = vpop.permute.xlu0 %958
        %962 = vrot.lane.b32.xlu0 %v908, 112
        %v963 = vpop.permute.xlu0 %962
        %v965 = vsel %vm384, %v813, %v911
        %v966 = vsel %vm386, %v965, %v915
        %v967 = vsel %vm388, %v966, %v919
        %v968 = vsel %vm390, %v967, %v923
        %v969 = vsel %vm392, %v968, %v927
        %v970 = vsel %vm394, %v969, %v931
        %v971 = vsel %vm396, %v970, %v935
        %v972 = vsel %vm384, %v881, %v939
        %v973 = vsel %vm386, %v972, %v943
        %v974 = vsel %vm388, %v973, %v947
        %v975 = vsel %vm390, %v974, %v951
        %v976 = vsel %vm392, %v975, %v955
        %v977 = vsel %vm394, %v976, %v959
        %v978 = vsel %vm396, %v977, %v963
        %v979 = vpack.c.bf16 %v971, %v971
        %v980 = vpack.c.bf16 %v978, %v978
        %v982 = vsel %vm647, %v172, 0
        %v985 = vsel %vm651, %v979, 0
        %v988 = vsel %vm651, %v980, 0
        %990 = vmatprep.subr.bf16.mxu0 %v988
        %991 = vmatpush1.bf16.msra.mxu0 %v985
        %992 = vmatprep.subr.bf16.mxu0 0
        %993 = vmatpush1.bf16.msra.mxu0 0
        %994 = vmatprep.subr.bf16.mxu0 0
        %995 = vmatpush1.bf16.msra.mxu0 0
        %996 = vmatprep.subr.bf16.mxu0 0
        %997 = vmatpush1.bf16.msra.mxu0 0
        %998 = vmatprep.subr.bf16.mxu0 0
        %999 = vmatpush1.bf16.msra.mxu0 0
        %1000 = vmatprep.subr.bf16.mxu0 0
        %1001 = vmatpush1.bf16.msra.mxu0 0
        %1002 = vmatprep.subr.bf16.mxu0 0
        %1003 = vmatpush1.bf16.msra.mxu0 0
        %1004 = vmatprep.subr.bf16.mxu0 0
        %1005 = vmatpush1.bf16.msra.mxu0 0
        %1006 = vmatprep.subr.bf16.mxu0 0
        %1007 = vmatpush1.bf16.msra.mxu0 0
        %1008 = vmatprep.subr.bf16.mxu0 0
        %1009 = vmatpush1.bf16.msra.mxu0 0
        %1010 = vmatprep.subr.bf16.mxu0 0
        %1011 = vmatpush1.bf16.msra.mxu0 0
        %1012 = vmatprep.subr.bf16.mxu0 0
        %1013 = vmatpush1.bf16.msra.mxu0 0
        %1014 = vmatprep.subr.bf16.mxu0 0
        %1015 = vmatpush1.bf16.msra.mxu0 0
        %1016 = vmatprep.subr.bf16.mxu0 0
        %1017 = vmatpush1.bf16.msra.mxu0 0
        %1018 = vmatprep.subr.bf16.mxu0 0
        %1019 = vmatpush1.bf16.msra.mxu0 0
        %1020 = vmatprep.subr.bf16.mxu0 0
        %1021 = vmatpush1.bf16.msra.mxu0 0
        %1022 = vmatprep.mubr.bf16.mxu0 0
        %1023 = vmatmul.mubr.bf16.gmra.mrb[0].mxu0 %v982
        %v1024 = vpop.f32.mrb[0].mxu0
        %v1025 = vadd.f32 0.0, %v1024
        %v1026 = vpop.f32.mrb[0].mxu0
        %v1027 = vadd.f32 0.0, %v1026
        %v1028 = vpop.f32.mrb[0].mxu0
        %v1029 = vpop.f32.mrb[0].mxu0
        %1030 = vdwg.mxu0
        %v1031 = vadd.f32 %v743, %v1025
        %v1032 = vadd.f32 %v745, %v1027
        %vm1037 = vcmask 1046528
        %v1038 = vrot.slane %v180, 1
        %v1039 = vrot.slane %v181, 1
        %v1040 = vsel %vm1037, %v1038, %v1039
        %v1041 = vrot.slane %v182, 1
        %v1042 = vsel %vm1037, %v1039, %v1041
        %v1043 = vrot.slane %v183, 1
        %v1044 = vrot.slane %v184, 1
        %v1045 = vsel %vm1037, %v1043, %v1044
        %v1046 = vrot.slane %v185, 1
        %v1047 = vsel %vm1037, %v1044, %v1046
        %v1048 = vrot.slane %v186, 1
        %v1049 = vrot.slane %v187, 1
        %v1050 = vsel %vm1037, %v1048, %v1049
        %v1051 = vrot.slane %v188, 1
        %v1052 = vsel %vm1037, %v1049, %v1051
        %v1053 = vrot.slane %v189, 1
        %v1054 = vrot.slane %v190, 1
        %v1055 = vsel %vm1037, %v1053, %v1054
        %v1056 = vrot.slane %v191, 1
        %v1057 = vsel %vm1037, %v1054, %v1056
        %v1066 = vcombine.low %v1040, %v1050
        %v1067 = vcombine.high %v1040, %v1050
        %v1069 = vunpack.c.l.s4 1983009808
        %v1070 = vunpack.c.0.s8 %v1069
        %v1071 = vlaneseq
        %v1072 = vshrl.u32 %v1071, 7
        %v1073 = vsub.s32 %v1070, %v1072
        %v1074 = vrot.slane %v1066, %v1073
        %v1076 = vunpack.c.l.s4 1983009808
        %v1077 = vunpack.c.0.s8 %v1076
        %v1078 = vlaneseq
        %v1079 = vshrl.u32 %v1078, 7
        %v1080 = vsub.s32 %v1077, %v1079
        %v1081 = vrot.slane %v1067, %v1080
        %v1082 = vcombine.low %v1045, %v1055
        %v1083 = vcombine.high %v1045, %v1055
        %v1085 = vunpack.c.l.s4 1983009808
        %v1086 = vunpack.c.0.s8 %v1085
        %v1087 = vlaneseq
        %v1088 = vshrl.u32 %v1087, 7
        %v1089 = vsub.s32 %v1086, %v1088
        %v1090 = vrot.slane %v1082, %v1089
        %v1092 = vunpack.c.l.s4 1983009808
        %v1093 = vunpack.c.0.s8 %v1092
        %v1094 = vlaneseq
        %v1095 = vshrl.u32 %v1094, 7
        %v1096 = vsub.s32 %v1093, %v1095
        %v1097 = vrot.slane %v1083, %v1096
        %v1098 = vcombine.low %v1074, %v1090
        %v1099 = vcombine.high %v1074, %v1090
        %v1101 = vunpack.c.l.s4 1934713408
        %v1102 = vunpack.c.0.s8 %v1101
        %v1103 = vlaneseq
        %v1104 = vshrl.u32 %v1103, 7
        %v1105 = vsub.s32 %v1102, %v1104
        %v1106 = vrot.slane %v1098, %v1105
        %v1108 = vunpack.c.l.s4 1934713408
        %v1109 = vunpack.c.0.s8 %v1108
        %v1110 = vlaneseq
        %v1111 = vshrl.u32 %v1110, 7
        %v1112 = vsub.s32 %v1109, %v1111
        %v1113 = vrot.slane %v1099, %v1112
        %v1114 = vcombine.low %v1081, %v1097
        %v1115 = vcombine.high %v1081, %v1097
        %v1117 = vunpack.c.l.s4 1934713408
        %v1118 = vunpack.c.0.s8 %v1117
        %v1119 = vlaneseq
        %v1120 = vshrl.u32 %v1119, 7
        %v1121 = vsub.s32 %v1118, %v1120
        %v1122 = vrot.slane %v1114, %v1121
        %v1124 = vunpack.c.l.s4 1934713408
        %v1125 = vunpack.c.0.s8 %v1124
        %v1126 = vlaneseq
        %v1127 = vshrl.u32 %v1126, 7
        %v1128 = vsub.s32 %v1125, %v1127
        %v1129 = vrot.slane %v1115, %v1128
        %v1130 = vcombine.high %v1106, 0.0
        %v1131 = vcombine.high %v1113, 0.0
        %v1132 = vcombine.high %v1122, 0.0
        %v1133 = vcombine.high %v1129, 0.0
        %v1134 = vcombine.low %v1042, %v1052
        %v1135 = vcombine.high %v1042, %v1052
        %v1137 = vunpack.c.l.s4 1983009808
        %v1138 = vunpack.c.0.s8 %v1137
        %v1139 = vlaneseq
        %v1140 = vshrl.u32 %v1139, 7
        %v1141 = vsub.s32 %v1138, %v1140
        %v1142 = vrot.slane %v1134, %v1141
        %v1144 = vunpack.c.l.s4 1983009808
        %v1145 = vunpack.c.0.s8 %v1144
        %v1146 = vlaneseq
        %v1147 = vshrl.u32 %v1146, 7
        %v1148 = vsub.s32 %v1145, %v1147
        %v1149 = vrot.slane %v1135, %v1148
        %v1150 = vcombine.low %v1047, %v1057
        %v1151 = vcombine.high %v1047, %v1057
        %v1153 = vunpack.c.l.s4 1983009808
        %v1154 = vunpack.c.0.s8 %v1153
        %v1155 = vlaneseq
        %v1156 = vshrl.u32 %v1155, 7
        %v1157 = vsub.s32 %v1154, %v1156
        %v1158 = vrot.slane %v1150, %v1157
        %v1160 = vunpack.c.l.s4 1983009808
        %v1161 = vunpack.c.0.s8 %v1160
        %v1162 = vlaneseq
        %v1163 = vshrl.u32 %v1162, 7
        %v1164 = vsub.s32 %v1161, %v1163
        %v1165 = vrot.slane %v1151, %v1164
        %v1166 = vcombine.low %v1142, %v1158
        %v1167 = vcombine.high %v1142, %v1158
        %v1169 = vunpack.c.l.s4 1934713408
        %v1170 = vunpack.c.0.s8 %v1169
        %v1171 = vlaneseq
        %v1172 = vshrl.u32 %v1171, 7
        %v1173 = vsub.s32 %v1170, %v1172
        %v1174 = vrot.slane %v1166, %v1173
        %v1176 = vunpack.c.l.s4 1934713408
        %v1177 = vunpack.c.0.s8 %v1176
        %v1178 = vlaneseq
        %v1179 = vshrl.u32 %v1178, 7
        %v1180 = vsub.s32 %v1177, %v1179
        %v1181 = vrot.slane %v1167, %v1180
        %v1182 = vcombine.low %v1149, %v1165
        %v1183 = vcombine.high %v1149, %v1165
        %v1185 = vunpack.c.l.s4 1934713408
        %v1186 = vunpack.c.0.s8 %v1185
        %v1187 = vlaneseq
        %v1188 = vshrl.u32 %v1187, 7
        %v1189 = vsub.s32 %v1186, %v1188
        %v1190 = vrot.slane %v1182, %v1189
        %v1192 = vunpack.c.l.s4 1934713408
        %v1193 = vunpack.c.0.s8 %v1192
        %v1194 = vlaneseq
        %v1195 = vshrl.u32 %v1194, 7
        %v1196 = vsub.s32 %v1193, %v1195
        %v1197 = vrot.slane %v1183, %v1196
        %v1198 = vcombine.high %v1174, 0.0
        %v1199 = vcombine.high %v1181, 0.0
        %v1200 = vcombine.high %v1190, 0.0
        %v1201 = vcombine.high %v1197, 0.0
        %1203 = vrot.lane.b32.xlu0 %v1130, 16
        %v1204 = vpop.permute.xlu0 %1203
        %1207 = vrot.lane.b32.xlu0 %v1113, 32
        %v1208 = vpop.permute.xlu0 %1207
        %1211 = vrot.lane.b32.xlu0 %v1131, 48
        %v1212 = vpop.permute.xlu0 %1211
        %1215 = vrot.lane.b32.xlu0 %v1122, 64
        %v1216 = vpop.permute.xlu0 %1215
        %1219 = vrot.lane.b32.xlu0 %v1132, 80
        %v1220 = vpop.permute.xlu0 %1219
        %1223 = vrot.lane.b32.xlu0 %v1129, 96
        %v1224 = vpop.permute.xlu0 %1223
        %1227 = vrot.lane.b32.xlu0 %v1133, 112
        %v1228 = vpop.permute.xlu0 %1227
        %1231 = vrot.lane.b32.xlu0 %v1198, 16
        %v1232 = vpop.permute.xlu0 %1231
        %1235 = vrot.lane.b32.xlu0 %v1181, 32
        %v1236 = vpop.permute.xlu0 %1235
        %1239 = vrot.lane.b32.xlu0 %v1199, 48
        %v1240 = vpop.permute.xlu0 %1239
        %1243 = vrot.lane.b32.xlu0 %v1190, 64
        %v1244 = vpop.permute.xlu0 %1243
        %1247 = vrot.lane.b32.xlu0 %v1200, 80
        %v1248 = vpop.permute.xlu0 %1247
        %1251 = vrot.lane.b32.xlu0 %v1197, 96
        %v1252 = vpop.permute.xlu0 %1251
        %1255 = vrot.lane.b32.xlu0 %v1201, 112
        %v1256 = vpop.permute.xlu0 %1255
        %v1258 = vsel %vm384, %v1106, %v1204
        %v1259 = vsel %vm386, %v1258, %v1208
        %v1260 = vsel %vm388, %v1259, %v1212
        %v1261 = vsel %vm390, %v1260, %v1216
        %v1262 = vsel %vm392, %v1261, %v1220
        %v1263 = vsel %vm394, %v1262, %v1224
        %v1264 = vsel %vm396, %v1263, %v1228
        %v1265 = vsel %vm384, %v1174, %v1232
        %v1266 = vsel %vm386, %v1265, %v1236
        %v1267 = vsel %vm388, %v1266, %v1240
        %v1268 = vsel %vm390, %v1267, %v1244
        %v1269 = vsel %vm392, %v1268, %v1248
        %v1270 = vsel %vm394, %v1269, %v1252
        %v1271 = vsel %vm396, %v1270, %v1256
        %v1272 = vpack.c.bf16 %v1264, %v1264
        %v1273 = vpack.c.bf16 %v1271, %v1271
        %v1275 = vsel %vm647, %v173, 0
        %v1278 = vsel %vm651, %v1272, 0
        %v1281 = vsel %vm651, %v1273, 0
        %1283 = vmatprep.subr.bf16.mxu0 %v1281
        %1284 = vmatpush1.bf16.msra.mxu0 %v1278
        %1285 = vmatprep.subr.bf16.mxu0 0
        %1286 = vmatpush1.bf16.msra.mxu0 0
        %1287 = vmatprep.subr.bf16.mxu0 0
        %1288 = vmatpush1.bf16.msra.mxu0 0
        %1289 = vmatprep.subr.bf16.mxu0 0
        %1290 = vmatpush1.bf16.msra.mxu0 0
        %1291 = vmatprep.subr.bf16.mxu0 0
        %1292 = vmatpush1.bf16.msra.mxu0 0
        %1293 = vmatprep.subr.bf16.mxu0 0
        %1294 = vmatpush1.bf16.msra.mxu0 0
        %1295 = vmatprep.subr.bf16.mxu0 0
        %1296 = vmatpush1.bf16.msra.mxu0 0
        %1297 = vmatprep.subr.bf16.mxu0 0
        %1298 = vmatpush1.bf16.msra.mxu0 0
        %1299 = vmatprep.subr.bf16.mxu0 0
        %1300 = vmatpush1.bf16.msra.mxu0 0
        %1301 = vmatprep.subr.bf16.mxu0 0
        %1302 = vmatpush1.bf16.msra.mxu0 0
        %1303 = vmatprep.subr.bf16.mxu0 0
        %1304 = vmatpush1.bf16.msra.mxu0 0
        %1305 = vmatprep.subr.bf16.mxu0 0
        %1306 = vmatpush1.bf16.msra.mxu0 0
        %1307 = vmatprep.subr.bf16.mxu0 0
        %1308 = vmatpush1.bf16.msra.mxu0 0
        %1309 = vmatprep.subr.bf16.mxu0 0
        %1310 = vmatpush1.bf16.msra.mxu0 0
        %1311 = vmatprep.subr.bf16.mxu0 0
        %1312 = vmatpush1.bf16.msra.mxu0 0
        %1313 = vmatprep.subr.bf16.mxu0 0
        %1314 = vmatpush1.bf16.msra.mxu0 0
        %1315 = vmatprep.mubr.bf16.mxu0 0
        %1316 = vmatmul.mubr.bf16.gmra.mrb[0].mxu0 %v1275
        %v1317 = vpop.f32.mrb[0].mxu0
        %v1318 = vadd.f32 0.0, %v1317
        %v1319 = vpop.f32.mrb[0].mxu0
        %v1320 = vadd.f32 0.0, %v1319
        %v1321 = vpop.f32.mrb[0].mxu0
        %v1322 = vpop.f32.mrb[0].mxu0
        %1323 = vdwg.mxu0
        %v1324 = vadd.f32 %v1031, %v1318
        %v1325 = vadd.f32 %v1032, %v1320
        %1326 = vrot.lane.b32.xlu0 %v1040, 127
        %v1327 = vpop.permute.xlu0 %1326
        %1328 = vrot.lane.b32.xlu0 %v1042, 127
        %v1329 = vpop.permute.xlu0 %1328
        %1330 = vrot.lane.b32.xlu0 %v1045, 127
        %v1331 = vpop.permute.xlu0 %1330
        %1332 = vrot.lane.b32.xlu0 %v1047, 127
        %v1333 = vpop.permute.xlu0 %1332
        %1334 = vrot.lane.b32.xlu0 %v1050, 127
        %v1335 = vpop.permute.xlu0 %1334
        %1336 = vrot.lane.b32.xlu0 %v1052, 127
        %v1337 = vpop.permute.xlu0 %1336
        %1338 = vrot.lane.b32.xlu0 %v1055, 127
        %v1339 = vpop.permute.xlu0 %1338
        %1340 = vrot.lane.b32.xlu0 %v1057, 127
        %v1341 = vpop.permute.xlu0 %1340
        %v1350 = vcombine.low %v1327, %v1335
        %v1351 = vcombine.high %v1327, %v1335
        %v1353 = vunpack.c.l.s4 1983009808
        %v1354 = vunpack.c.0.s8 %v1353
        %v1355 = vlaneseq
        %v1356 = vshrl.u32 %v1355, 7
        %v1357 = vsub.s32 %v1354, %v1356
        %v1358 = vrot.slane %v1350, %v1357
        %v1360 = vunpack.c.l.s4 1983009808
        %v1361 = vunpack.c.0.s8 %v1360
        %v1362 = vlaneseq
        %v1363 = vshrl.u32 %v1362, 7
        %v1364 = vsub.s32 %v1361, %v1363
        %v1365 = vrot.slane %v1351, %v1364
        %v1366 = vcombine.low %v1331, %v1339
        %v1367 = vcombine.high %v1331, %v1339
        %v1369 = vunpack.c.l.s4 1983009808
        %v1370 = vunpack.c.0.s8 %v1369
        %v1371 = vlaneseq
        %v1372 = vshrl.u32 %v1371, 7
        %v1373 = vsub.s32 %v1370, %v1372
        %v1374 = vrot.slane %v1366, %v1373
        %v1376 = vunpack.c.l.s4 1983009808
        %v1377 = vunpack.c.0.s8 %v1376
        %v1378 = vlaneseq
        %v1379 = vshrl.u32 %v1378, 7
        %v1380 = vsub.s32 %v1377, %v1379
        %v1381 = vrot.slane %v1367, %v1380
        %v1382 = vcombine.low %v1358, %v1374
        %v1383 = vcombine.high %v1358, %v1374
        %v1385 = vunpack.c.l.s4 1934713408
        %v1386 = vunpack.c.0.s8 %v1385
        %v1387 = vlaneseq
        %v1388 = vshrl.u32 %v1387, 7
        %v1389 = vsub.s32 %v1386, %v1388
        %v1390 = vrot.slane %v1382, %v1389
        %v1392 = vunpack.c.l.s4 1934713408
        %v1393 = vunpack.c.0.s8 %v1392
        %v1394 = vlaneseq
        %v1395 = vshrl.u32 %v1394, 7
        %v1396 = vsub.s32 %v1393, %v1395
        %v1397 = vrot.slane %v1383, %v1396
        %v1398 = vcombine.low %v1365, %v1381
        %v1399 = vcombine.high %v1365, %v1381
        %v1401 = vunpack.c.l.s4 1934713408
        %v1402 = vunpack.c.0.s8 %v1401
        %v1403 = vlaneseq
        %v1404 = vshrl.u32 %v1403, 7
        %v1405 = vsub.s32 %v1402, %v1404
        %v1406 = vrot.slane %v1398, %v1405
        %v1408 = vunpack.c.l.s4 1934713408
        %v1409 = vunpack.c.0.s8 %v1408
        %v1410 = vlaneseq
        %v1411 = vshrl.u32 %v1410, 7
        %v1412 = vsub.s32 %v1409, %v1411
        %v1413 = vrot.slane %v1399, %v1412
        %v1414 = vcombine.high %v1390, 0.0
        %v1415 = vcombine.high %v1397, 0.0
        %v1416 = vcombine.high %v1406, 0.0
        %v1417 = vcombine.high %v1413, 0.0
        %v1418 = vcombine.low %v1329, %v1337
        %v1419 = vcombine.high %v1329, %v1337
        %v1421 = vunpack.c.l.s4 1983009808
        %v1422 = vunpack.c.0.s8 %v1421
        %v1423 = vlaneseq
        %v1424 = vshrl.u32 %v1423, 7
        %v1425 = vsub.s32 %v1422, %v1424
        %v1426 = vrot.slane %v1418, %v1425
        %v1428 = vunpack.c.l.s4 1983009808
        %v1429 = vunpack.c.0.s8 %v1428
        %v1430 = vlaneseq
        %v1431 = vshrl.u32 %v1430, 7
        %v1432 = vsub.s32 %v1429, %v1431
        %v1433 = vrot.slane %v1419, %v1432
        %v1434 = vcombine.low %v1333, %v1341
        %v1435 = vcombine.high %v1333, %v1341
        %v1437 = vunpack.c.l.s4 1983009808
        %v1438 = vunpack.c.0.s8 %v1437
        %v1439 = vlaneseq
        %v1440 = vshrl.u32 %v1439, 7
        %v1441 = vsub.s32 %v1438, %v1440
        %v1442 = vrot.slane %v1434, %v1441
        %v1444 = vunpack.c.l.s4 1983009808
        %v1445 = vunpack.c.0.s8 %v1444
        %v1446 = vlaneseq
        %v1447 = vshrl.u32 %v1446, 7
        %v1448 = vsub.s32 %v1445, %v1447
        %v1449 = vrot.slane %v1435, %v1448
        %v1450 = vcombine.low %v1426, %v1442
        %v1451 = vcombine.high %v1426, %v1442
        %v1453 = vunpack.c.l.s4 1934713408
        %v1454 = vunpack.c.0.s8 %v1453
        %v1455 = vlaneseq
        %v1456 = vshrl.u32 %v1455, 7
        %v1457 = vsub.s32 %v1454, %v1456
        %v1458 = vrot.slane %v1450, %v1457
        %v1460 = vunpack.c.l.s4 1934713408
        %v1461 = vunpack.c.0.s8 %v1460
        %v1462 = vlaneseq
        %v1463 = vshrl.u32 %v1462, 7
        %v1464 = vsub.s32 %v1461, %v1463
        %v1465 = vrot.slane %v1451, %v1464
        %v1466 = vcombine.low %v1433, %v1449
        %v1467 = vcombine.high %v1433, %v1449
        %v1469 = vunpack.c.l.s4 1934713408
        %v1470 = vunpack.c.0.s8 %v1469
        %v1471 = vlaneseq
        %v1472 = vshrl.u32 %v1471, 7
        %v1473 = vsub.s32 %v1470, %v1472
        %v1474 = vrot.slane %v1466, %v1473
        %v1476 = vunpack.c.l.s4 1934713408
        %v1477 = vunpack.c.0.s8 %v1476
        %v1478 = vlaneseq
        %v1479 = vshrl.u32 %v1478, 7
        %v1480 = vsub.s32 %v1477, %v1479
        %v1481 = vrot.slane %v1467, %v1480
        %v1482 = vcombine.high %v1458, 0.0
        %v1483 = vcombine.high %v1465, 0.0
        %v1484 = vcombine.high %v1474, 0.0
        %v1485 = vcombine.high %v1481, 0.0
        %1487 = vrot.lane.b32.xlu0 %v1414, 16
        %v1488 = vpop.permute.xlu0 %1487
        %1491 = vrot.lane.b32.xlu0 %v1397, 32
        %v1492 = vpop.permute.xlu0 %1491
        %1495 = vrot.lane.b32.xlu0 %v1415, 48
        %v1496 = vpop.permute.xlu0 %1495
        %1499 = vrot.lane.b32.xlu0 %v1406, 64
        %v1500 = vpop.permute.xlu0 %1499
        %1503 = vrot.lane.b32.xlu0 %v1416, 80
        %v1504 = vpop.permute.xlu0 %1503
        %1507 = vrot.lane.b32.xlu0 %v1413, 96
        %v1508 = vpop.permute.xlu0 %1507
        %1511 = vrot.lane.b32.xlu0 %v1417, 112
        %v1512 = vpop.permute.xlu0 %1511
        %1515 = vrot.lane.b32.xlu0 %v1482, 16
        %v1516 = vpop.permute.xlu0 %1515
        %1519 = vrot.lane.b32.xlu0 %v1465, 32
        %v1520 = vpop.permute.xlu0 %1519
        %1523 = vrot.lane.b32.xlu0 %v1483, 48
        %v1524 = vpop.permute.xlu0 %1523
        %1527 = vrot.lane.b32.xlu0 %v1474, 64
        %v1528 = vpop.permute.xlu0 %1527
        %1531 = vrot.lane.b32.xlu0 %v1484, 80
        %v1532 = vpop.permute.xlu0 %1531
        %1535 = vrot.lane.b32.xlu0 %v1481, 96
        %v1536 = vpop.permute.xlu0 %1535
        %1539 = vrot.lane.b32.xlu0 %v1485, 112
        %v1540 = vpop.permute.xlu0 %1539
        %v1542 = vsel %vm384, %v1390, %v1488
        %v1543 = vsel %vm386, %v1542, %v1492
        %v1544 = vsel %vm388, %v1543, %v1496
        %v1545 = vsel %vm390, %v1544, %v1500
        %v1546 = vsel %vm392, %v1545, %v1504
        %v1547 = vsel %vm394, %v1546, %v1508
        %v1548 = vsel %vm396, %v1547, %v1512
        %v1549 = vsel %vm384, %v1458, %v1516
        %v1550 = vsel %vm386, %v1549, %v1520
        %v1551 = vsel %vm388, %v1550, %v1524
        %v1552 = vsel %vm390, %v1551, %v1528
        %v1553 = vsel %vm392, %v1552, %v1532
        %v1554 = vsel %vm394, %v1553, %v1536
        %v1555 = vsel %vm396, %v1554, %v1540
        %v1556 = vpack.c.bf16 %v1548, %v1548
        %v1557 = vpack.c.bf16 %v1555, %v1555
        %v1559 = vsel %vm647, %v174, 0
        %v1562 = vsel %vm651, %v1556, 0
        %v1565 = vsel %vm651, %v1557, 0
        %1567 = vmatprep.subr.bf16.mxu0 %v1565
        %1568 = vmatpush1.bf16.msra.mxu0 %v1562
        %1569 = vmatprep.subr.bf16.mxu0 0
        %1570 = vmatpush1.bf16.msra.mxu0 0
        %1571 = vmatprep.subr.bf16.mxu0 0
        %1572 = vmatpush1.bf16.msra.mxu0 0
        %1573 = vmatprep.subr.bf16.mxu0 0
        %1574 = vmatpush1.bf16.msra.mxu0 0
        %1575 = vmatprep.subr.bf16.mxu0 0
        %1576 = vmatpush1.bf16.msra.mxu0 0
        %1577 = vmatprep.subr.bf16.mxu0 0
        %1578 = vmatpush1.bf16.msra.mxu0 0
        %1579 = vmatprep.subr.bf16.mxu0 0
        %1580 = vmatpush1.bf16.msra.mxu0 0
        %1581 = vmatprep.subr.bf16.mxu0 0
        %1582 = vmatpush1.bf16.msra.mxu0 0
        %1583 = vmatprep.subr.bf16.mxu0 0
        %1584 = vmatpush1.bf16.msra.mxu0 0
        %1585 = vmatprep.subr.bf16.mxu0 0
        %1586 = vmatpush1.bf16.msra.mxu0 0
        %1587 = vmatprep.subr.bf16.mxu0 0
        %1588 = vmatpush1.bf16.msra.mxu0 0
        %1589 = vmatprep.subr.bf16.mxu0 0
        %1590 = vmatpush1.bf16.msra.mxu0 0
        %1591 = vmatprep.subr.bf16.mxu0 0
        %1592 = vmatpush1.bf16.msra.mxu0 0
        %1593 = vmatprep.subr.bf16.mxu0 0
        %1594 = vmatpush1.bf16.msra.mxu0 0
        %1595 = vmatprep.subr.bf16.mxu0 0
        %1596 = vmatpush1.bf16.msra.mxu0 0
        %1597 = vmatprep.subr.bf16.mxu0 0
        %1598 = vmatpush1.bf16.msra.mxu0 0
        %1599 = vmatprep.mubr.bf16.mxu0 0
        %1600 = vmatmul.mubr.bf16.gmra.mrb[0].mxu0 %v1559
        %v1601 = vpop.f32.mrb[0].mxu0
        %v1602 = vadd.f32 0.0, %v1601
        %v1603 = vpop.f32.mrb[0].mxu0
        %v1604 = vadd.f32 0.0, %v1603
        %v1605 = vpop.f32.mrb[0].mxu0
        %v1606 = vpop.f32.mrb[0].mxu0
        %1607 = vdwg.mxu0
        %v1608 = vadd.f32 %v1324, %v1602
        %v1609 = vadd.f32 %v1325, %v1604
        %1610 = vrot.lane.b32.xlu0 %v1040, 126
        %v1611 = vpop.permute.xlu0 %1610
        %1612 = vrot.lane.b32.xlu0 %v1042, 126
        %v1613 = vpop.permute.xlu0 %1612
        %1614 = vrot.lane.b32.xlu0 %v1045, 126
        %v1615 = vpop.permute.xlu0 %1614
        %1616 = vrot.lane.b32.xlu0 %v1047, 126
        %v1617 = vpop.permute.xlu0 %1616
        %1618 = vrot.lane.b32.xlu0 %v1050, 126
        %v1619 = vpop.permute.xlu0 %1618
        %1620 = vrot.lane.b32.xlu0 %v1052, 126
        %v1621 = vpop.permute.xlu0 %1620
        %1622 = vrot.lane.b32.xlu0 %v1055, 126
        %v1623 = vpop.permute.xlu0 %1622
        %1624 = vrot.lane.b32.xlu0 %v1057, 126
        %v1625 = vpop.permute.xlu0 %1624
        %v1634 = vcombine.low %v1611, %v1619
        %v1635 = vcombine.high %v1611, %v1619
        %v1637 = vunpack.c.l.s4 1983009808
        %v1638 = vunpack.c.0.s8 %v1637
        %v1639 = vlaneseq
        %v1640 = vshrl.u32 %v1639, 7
        %v1641 = vsub.s32 %v1638, %v1640
        %v1642 = vrot.slane %v1634, %v1641
        %v1644 = vunpack.c.l.s4 1983009808
        %v1645 = vunpack.c.0.s8 %v1644
        %v1646 = vlaneseq
        %v1647 = vshrl.u32 %v1646, 7
        %v1648 = vsub.s32 %v1645, %v1647
        %v1649 = vrot.slane %v1635, %v1648
        %v1650 = vcombine.low %v1615, %v1623
        %v1651 = vcombine.high %v1615, %v1623
        %v1653 = vunpack.c.l.s4 1983009808
        %v1654 = vunpack.c.0.s8 %v1653
        %v1655 = vlaneseq
        %v1656 = vshrl.u32 %v1655, 7
        %v1657 = vsub.s32 %v1654, %v1656
        %v1658 = vrot.slane %v1650, %v1657
        %v1660 = vunpack.c.l.s4 1983009808
        %v1661 = vunpack.c.0.s8 %v1660
        %v1662 = vlaneseq
        %v1663 = vshrl.u32 %v1662, 7
        %v1664 = vsub.s32 %v1661, %v1663
        %v1665 = vrot.slane %v1651, %v1664
        %v1666 = vcombine.low %v1642, %v1658
        %v1667 = vcombine.high %v1642, %v1658
        %v1669 = vunpack.c.l.s4 1934713408
        %v1670 = vunpack.c.0.s8 %v1669
        %v1671 = vlaneseq
        %v1672 = vshrl.u32 %v1671, 7
        %v1673 = vsub.s32 %v1670, %v1672
        %v1674 = vrot.slane %v1666, %v1673
        %v1676 = vunpack.c.l.s4 1934713408
        %v1677 = vunpack.c.0.s8 %v1676
        %v1678 = vlaneseq
        %v1679 = vshrl.u32 %v1678, 7
        %v1680 = vsub.s32 %v1677, %v1679
        %v1681 = vrot.slane %v1667, %v1680
        %v1682 = vcombine.low %v1649, %v1665
        %v1683 = vcombine.high %v1649, %v1665
        %v1685 = vunpack.c.l.s4 1934713408
        %v1686 = vunpack.c.0.s8 %v1685
        %v1687 = vlaneseq
        %v1688 = vshrl.u32 %v1687, 7
        %v1689 = vsub.s32 %v1686, %v1688
        %v1690 = vrot.slane %v1682, %v1689
        %v1692 = vunpack.c.l.s4 1934713408
        %v1693 = vunpack.c.0.s8 %v1692
        %v1694 = vlaneseq
        %v1695 = vshrl.u32 %v1694, 7
        %v1696 = vsub.s32 %v1693, %v1695
        %v1697 = vrot.slane %v1683, %v1696
        %v1698 = vcombine.high %v1674, 0.0
        %v1699 = vcombine.high %v1681, 0.0
        %v1700 = vcombine.high %v1690, 0.0
        %v1701 = vcombine.high %v1697, 0.0
        %v1702 = vcombine.low %v1613, %v1621
        %v1703 = vcombine.high %v1613, %v1621
        %v1705 = vunpack.c.l.s4 1983009808
        %v1706 = vunpack.c.0.s8 %v1705
        %v1707 = vlaneseq
        %v1708 = vshrl.u32 %v1707, 7
        %v1709 = vsub.s32 %v1706, %v1708
        %v1710 = vrot.slane %v1702, %v1709
        %v1712 = vunpack.c.l.s4 1983009808
        %v1713 = vunpack.c.0.s8 %v1712
        %v1714 = vlaneseq
        %v1715 = vshrl.u32 %v1714, 7
        %v1716 = vsub.s32 %v1713, %v1715
        %v1717 = vrot.slane %v1703, %v1716
        %v1718 = vcombine.low %v1617, %v1625
        %v1719 = vcombine.high %v1617, %v1625
        %v1721 = vunpack.c.l.s4 1983009808
        %v1722 = vunpack.c.0.s8 %v1721
        %v1723 = vlaneseq
        %v1724 = vshrl.u32 %v1723, 7
        %v1725 = vsub.s32 %v1722, %v1724
        %v1726 = vrot.slane %v1718, %v1725
        %v1728 = vunpack.c.l.s4 1983009808
        %v1729 = vunpack.c.0.s8 %v1728
        %v1730 = vlaneseq
        %v1731 = vshrl.u32 %v1730, 7
        %v1732 = vsub.s32 %v1729, %v1731
        %v1733 = vrot.slane %v1719, %v1732
        %v1734 = vcombine.low %v1710, %v1726
        %v1735 = vcombine.high %v1710, %v1726
        %v1737 = vunpack.c.l.s4 1934713408
        %v1738 = vunpack.c.0.s8 %v1737
        %v1739 = vlaneseq
        %v1740 = vshrl.u32 %v1739, 7
        %v1741 = vsub.s32 %v1738, %v1740
        %v1742 = vrot.slane %v1734, %v1741
        %v1744 = vunpack.c.l.s4 1934713408
        %v1745 = vunpack.c.0.s8 %v1744
        %v1746 = vlaneseq
        %v1747 = vshrl.u32 %v1746, 7
        %v1748 = vsub.s32 %v1745, %v1747
        %v1749 = vrot.slane %v1735, %v1748
        %v1750 = vcombine.low %v1717, %v1733
        %v1751 = vcombine.high %v1717, %v1733
        %v1753 = vunpack.c.l.s4 1934713408
        %v1754 = vunpack.c.0.s8 %v1753
        %v1755 = vlaneseq
        %v1756 = vshrl.u32 %v1755, 7
        %v1757 = vsub.s32 %v1754, %v1756
        %v1758 = vrot.slane %v1750, %v1757
        %v1760 = vunpack.c.l.s4 1934713408
        %v1761 = vunpack.c.0.s8 %v1760
        %v1762 = vlaneseq
        %v1763 = vshrl.u32 %v1762, 7
        %v1764 = vsub.s32 %v1761, %v1763
        %v1765 = vrot.slane %v1751, %v1764
        %v1766 = vcombine.high %v1742, 0.0
        %v1767 = vcombine.high %v1749, 0.0
        %v1768 = vcombine.high %v1758, 0.0
        %v1769 = vcombine.high %v1765, 0.0
        %1771 = vrot.lane.b32.xlu0 %v1698, 16
        %v1772 = vpop.permute.xlu0 %1771
        %1775 = vrot.lane.b32.xlu0 %v1681, 32
        %v1776 = vpop.permute.xlu0 %1775
        %1779 = vrot.lane.b32.xlu0 %v1699, 48
        %v1780 = vpop.permute.xlu0 %1779
        %1783 = vrot.lane.b32.xlu0 %v1690, 64
        %v1784 = vpop.permute.xlu0 %1783
        %1787 = vrot.lane.b32.xlu0 %v1700, 80
        %v1788 = vpop.permute.xlu0 %1787
        %1791 = vrot.lane.b32.xlu0 %v1697, 96
        %v1792 = vpop.permute.xlu0 %1791
        %1795 = vrot.lane.b32.xlu0 %v1701, 112
        %v1796 = vpop.permute.xlu0 %1795
        %1799 = vrot.lane.b32.xlu0 %v1766, 16
        %v1800 = vpop.permute.xlu0 %1799
        %1803 = vrot.lane.b32.xlu0 %v1749, 32
        %v1804 = vpop.permute.xlu0 %1803
        %1807 = vrot.lane.b32.xlu0 %v1767, 48
        %v1808 = vpop.permute.xlu0 %1807
        %1811 = vrot.lane.b32.xlu0 %v1758, 64
        %v1812 = vpop.permute.xlu0 %1811
        %1815 = vrot.lane.b32.xlu0 %v1768, 80
        %v1816 = vpop.permute.xlu0 %1815
        %1819 = vrot.lane.b32.xlu0 %v1765, 96
        %v1820 = vpop.permute.xlu0 %1819
        %1823 = vrot.lane.b32.xlu0 %v1769, 112
        %v1824 = vpop.permute.xlu0 %1823
        %v1826 = vsel %vm384, %v1674, %v1772
        %v1827 = vsel %vm386, %v1826, %v1776
        %v1828 = vsel %vm388, %v1827, %v1780
        %v1829 = vsel %vm390, %v1828, %v1784
        %v1830 = vsel %vm392, %v1829, %v1788
        %v1831 = vsel %vm394, %v1830, %v1792
        %v1832 = vsel %vm396, %v1831, %v1796
        %v1833 = vsel %vm384, %v1742, %v1800
        %v1834 = vsel %vm386, %v1833, %v1804
        %v1835 = vsel %vm388, %v1834, %v1808
        %v1836 = vsel %vm390, %v1835, %v1812
        %v1837 = vsel %vm392, %v1836, %v1816
        %v1838 = vsel %vm394, %v1837, %v1820
        %v1839 = vsel %vm396, %v1838, %v1824
        %v1840 = vpack.c.bf16 %v1832, %v1832
        %v1841 = vpack.c.bf16 %v1839, %v1839
        %v1843 = vsel %vm647, %v175, 0
        %v1846 = vsel %vm651, %v1840, 0
        %v1849 = vsel %vm651, %v1841, 0
        %1851 = vmatprep.subr.bf16.mxu0 %v1849
        %1852 = vmatpush1.bf16.msra.mxu0 %v1846
        %1853 = vmatprep.subr.bf16.mxu0 0
        %1854 = vmatpush1.bf16.msra.mxu0 0
        %1855 = vmatprep.subr.bf16.mxu0 0
        %1856 = vmatpush1.bf16.msra.mxu0 0
        %1857 = vmatprep.subr.bf16.mxu0 0
        %1858 = vmatpush1.bf16.msra.mxu0 0
        %1859 = vmatprep.subr.bf16.mxu0 0
        %1860 = vmatpush1.bf16.msra.mxu0 0
        %1861 = vmatprep.subr.bf16.mxu0 0
        %1862 = vmatpush1.bf16.msra.mxu0 0
        %1863 = vmatprep.subr.bf16.mxu0 0
        %1864 = vmatpush1.bf16.msra.mxu0 0
        %1865 = vmatprep.subr.bf16.mxu0 0
        %1866 = vmatpush1.bf16.msra.mxu0 0
        %1867 = vmatprep.subr.bf16.mxu0 0
        %1868 = vmatpush1.bf16.msra.mxu0 0
        %1869 = vmatprep.subr.bf16.mxu0 0
        %1870 = vmatpush1.bf16.msra.mxu0 0
        %1871 = vmatprep.subr.bf16.mxu0 0
        %1872 = vmatpush1.bf16.msra.mxu0 0
        %1873 = vmatprep.subr.bf16.mxu0 0
        %1874 = vmatpush1.bf16.msra.mxu0 0
        %1875 = vmatprep.subr.bf16.mxu0 0
        %1876 = vmatpush1.bf16.msra.mxu0 0
        %1877 = vmatprep.subr.bf16.mxu0 0
        %1878 = vmatpush1.bf16.msra.mxu0 0
        %1879 = vmatprep.subr.bf16.mxu0 0
        %1880 = vmatpush1.bf16.msra.mxu0 0
        %1881 = vmatprep.subr.bf16.mxu0 0
        %1882 = vmatpush1.bf16.msra.mxu0 0
        %1883 = vmatprep.mubr.bf16.mxu0 0
        %1884 = vmatmul.mubr.bf16.gmra.mrb[0].mxu0 %v1843
        %v1885 = vpop.f32.mrb[0].mxu0
        %v1886 = vadd.f32 0.0, %v1885
        %v1887 = vpop.f32.mrb[0].mxu0
        %v1888 = vadd.f32 0.0, %v1887
        %v1889 = vpop.f32.mrb[0].mxu0
        %v1890 = vpop.f32.mrb[0].mxu0
        %1891 = vdwg.mxu0
        %v1892 = vadd.f32 %v1608, %v1886
        %v1893 = vadd.f32 %v1609, %v1888
        %vm1894 = vcmask 1045504
        %v1895 = vrot.slane %v180, 2
        %v1896 = vrot.slane %v181, 2
        %v1897 = vsel %vm1894, %v1895, %v1896
        %v1898 = vrot.slane %v182, 2
        %v1899 = vsel %vm1894, %v1896, %v1898
        %v1900 = vrot.slane %v183, 2
        %v1901 = vrot.slane %v184, 2
        %v1902 = vsel %vm1894, %v1900, %v1901
        %v1903 = vrot.slane %v185, 2
        %v1904 = vsel %vm1894, %v1901, %v1903
        %v1905 = vrot.slane %v186, 2
        %v1906 = vrot.slane %v187, 2
        %v1907 = vsel %vm1894, %v1905, %v1906
        %v1908 = vrot.slane %v188, 2
        %v1909 = vsel %vm1894, %v1906, %v1908
        %v1910 = vrot.slane %v189, 2
        %v1911 = vrot.slane %v190, 2
        %v1912 = vsel %vm1894, %v1910, %v1911
        %v1913 = vrot.slane %v191, 2
        %v1914 = vsel %vm1894, %v1911, %v1913
        %v1923 = vcombine.low %v1897, %v1907
        %v1924 = vcombine.high %v1897, %v1907
        %v1926 = vunpack.c.l.s4 1983009808
        %v1927 = vunpack.c.0.s8 %v1926
        %v1928 = vlaneseq
        %v1929 = vshrl.u32 %v1928, 7
        %v1930 = vsub.s32 %v1927, %v1929
        %v1931 = vrot.slane %v1923, %v1930
        %v1933 = vunpack.c.l.s4 1983009808
        %v1934 = vunpack.c.0.s8 %v1933
        %v1935 = vlaneseq
        %v1936 = vshrl.u32 %v1935, 7
        %v1937 = vsub.s32 %v1934, %v1936
        %v1938 = vrot.slane %v1924, %v1937
        %v1939 = vcombine.low %v1902, %v1912
        %v1940 = vcombine.high %v1902, %v1912
        %v1942 = vunpack.c.l.s4 1983009808
        %v1943 = vunpack.c.0.s8 %v1942
        %v1944 = vlaneseq
        %v1945 = vshrl.u32 %v1944, 7
        %v1946 = vsub.s32 %v1943, %v1945
        %v1947 = vrot.slane %v1939, %v1946
        %v1949 = vunpack.c.l.s4 1983009808
        %v1950 = vunpack.c.0.s8 %v1949
        %v1951 = vlaneseq
        %v1952 = vshrl.u32 %v1951, 7
        %v1953 = vsub.s32 %v1950, %v1952
        %v1954 = vrot.slane %v1940, %v1953
        %v1955 = vcombine.low %v1931, %v1947
        %v1956 = vcombine.high %v1931, %v1947
        %v1958 = vunpack.c.l.s4 1934713408
        %v1959 = vunpack.c.0.s8 %v1958
        %v1960 = vlaneseq
        %v1961 = vshrl.u32 %v1960, 7
        %v1962 = vsub.s32 %v1959, %v1961
        %v1963 = vrot.slane %v1955, %v1962
        %v1965 = vunpack.c.l.s4 1934713408
        %v1966 = vunpack.c.0.s8 %v1965
        %v1967 = vlaneseq
        %v1968 = vshrl.u32 %v1967, 7
        %v1969 = vsub.s32 %v1966, %v1968
        %v1970 = vrot.slane %v1956, %v1969
        %v1971 = vcombine.low %v1938, %v1954
        %v1972 = vcombine.high %v1938, %v1954
        %v1974 = vunpack.c.l.s4 1934713408
        %v1975 = vunpack.c.0.s8 %v1974
        %v1976 = vlaneseq
        %v1977 = vshrl.u32 %v1976, 7
        %v1978 = vsub.s32 %v1975, %v1977
        %v1979 = vrot.slane %v1971, %v1978
        %v1981 = vunpack.c.l.s4 1934713408
        %v1982 = vunpack.c.0.s8 %v1981
        %v1983 = vlaneseq
        %v1984 = vshrl.u32 %v1983, 7
        %v1985 = vsub.s32 %v1982, %v1984
        %v1986 = vrot.slane %v1972, %v1985
        %v1987 = vcombine.high %v1963, 0.0
        %v1988 = vcombine.high %v1970, 0.0
        %v1989 = vcombine.high %v1979, 0.0
        %v1990 = vcombine.high %v1986, 0.0
        %v1991 = vcombine.low %v1899, %v1909
        %v1992 = vcombine.high %v1899, %v1909
        %v1994 = vunpack.c.l.s4 1983009808
        %v1995 = vunpack.c.0.s8 %v1994
        %v1996 = vlaneseq
        %v1997 = vshrl.u32 %v1996, 7
        %v1998 = vsub.s32 %v1995, %v1997
        %v1999 = vrot.slane %v1991, %v1998
        %v2001 = vunpack.c.l.s4 1983009808
        %v2002 = vunpack.c.0.s8 %v2001
        %v2003 = vlaneseq
        %v2004 = vshrl.u32 %v2003, 7
        %v2005 = vsub.s32 %v2002, %v2004
        %v2006 = vrot.slane %v1992, %v2005
        %v2007 = vcombine.low %v1904, %v1914
        %v2008 = vcombine.high %v1904, %v1914
        %v2010 = vunpack.c.l.s4 1983009808
        %v2011 = vunpack.c.0.s8 %v2010
        %v2012 = vlaneseq
        %v2013 = vshrl.u32 %v2012, 7
        %v2014 = vsub.s32 %v2011, %v2013
        %v2015 = vrot.slane %v2007, %v2014
        %v2017 = vunpack.c.l.s4 1983009808
        %v2018 = vunpack.c.0.s8 %v2017
        %v2019 = vlaneseq
        %v2020 = vshrl.u32 %v2019, 7
        %v2021 = vsub.s32 %v2018, %v2020
        %v2022 = vrot.slane %v2008, %v2021
        %v2023 = vcombine.low %v1999, %v2015
        %v2024 = vcombine.high %v1999, %v2015
        %v2026 = vunpack.c.l.s4 1934713408
        %v2027 = vunpack.c.0.s8 %v2026
        %v2028 = vlaneseq
        %v2029 = vshrl.u32 %v2028, 7
        %v2030 = vsub.s32 %v2027, %v2029
        %v2031 = vrot.slane %v2023, %v2030
        %v2033 = vunpack.c.l.s4 1934713408
        %v2034 = vunpack.c.0.s8 %v2033
        %v2035 = vlaneseq
        %v2036 = vshrl.u32 %v2035, 7
        %v2037 = vsub.s32 %v2034, %v2036
        %v2038 = vrot.slane %v2024, %v2037
        %v2039 = vcombine.low %v2006, %v2022
        %v2040 = vcombine.high %v2006, %v2022
        %v2042 = vunpack.c.l.s4 1934713408
        %v2043 = vunpack.c.0.s8 %v2042
        %v2044 = vlaneseq
        %v2045 = vshrl.u32 %v2044, 7
        %v2046 = vsub.s32 %v2043, %v2045
        %v2047 = vrot.slane %v2039, %v2046
        %v2049 = vunpack.c.l.s4 1934713408
        %v2050 = vunpack.c.0.s8 %v2049
        %v2051 = vlaneseq
        %v2052 = vshrl.u32 %v2051, 7
        %v2053 = vsub.s32 %v2050, %v2052
        %v2054 = vrot.slane %v2040, %v2053
        %v2055 = vcombine.high %v2031, 0.0
        %v2056 = vcombine.high %v2038, 0.0
        %v2057 = vcombine.high %v2047, 0.0
        %v2058 = vcombine.high %v2054, 0.0
        %2060 = vrot.lane.b32.xlu0 %v1987, 16
        %v2061 = vpop.permute.xlu0 %2060
        %2064 = vrot.lane.b32.xlu0 %v1970, 32
        %v2065 = vpop.permute.xlu0 %2064
        %2068 = vrot.lane.b32.xlu0 %v1988, 48
        %v2069 = vpop.permute.xlu0 %2068
        %2072 = vrot.lane.b32.xlu0 %v1979, 64
        %v2073 = vpop.permute.xlu0 %2072
        %2076 = vrot.lane.b32.xlu0 %v1989, 80
        %v2077 = vpop.permute.xlu0 %2076
        %2080 = vrot.lane.b32.xlu0 %v1986, 96
        %v2081 = vpop.permute.xlu0 %2080
        %2084 = vrot.lane.b32.xlu0 %v1990, 112
        %v2085 = vpop.permute.xlu0 %2084
        %2088 = vrot.lane.b32.xlu0 %v2055, 16
        %v2089 = vpop.permute.xlu0 %2088
        %2092 = vrot.lane.b32.xlu0 %v2038, 32
        %v2093 = vpop.permute.xlu0 %2092
        %2096 = vrot.lane.b32.xlu0 %v2056, 48
        %v2097 = vpop.permute.xlu0 %2096
        %2100 = vrot.lane.b32.xlu0 %v2047, 64
        %v2101 = vpop.permute.xlu0 %2100
        %2104 = vrot.lane.b32.xlu0 %v2057, 80
        %v2105 = vpop.permute.xlu0 %2104
        %2108 = vrot.lane.b32.xlu0 %v2054, 96
        %v2109 = vpop.permute.xlu0 %2108
        %2112 = vrot.lane.b32.xlu0 %v2058, 112
        %v2113 = vpop.permute.xlu0 %2112
        %v2115 = vsel %vm384, %v1963, %v2061
        %v2116 = vsel %vm386, %v2115, %v2065
        %v2117 = vsel %vm388, %v2116, %v2069
        %v2118 = vsel %vm390, %v2117, %v2073
        %v2119 = vsel %vm392, %v2118, %v2077
        %v2120 = vsel %vm394, %v2119, %v2081
        %v2121 = vsel %vm396, %v2120, %v2085
        %v2122 = vsel %vm384, %v2031, %v2089
        %v2123 = vsel %vm386, %v2122, %v2093
        %v2124 = vsel %vm388, %v2123, %v2097
        %v2125 = vsel %vm390, %v2124, %v2101
        %v2126 = vsel %vm392, %v2125, %v2105
        %v2127 = vsel %vm394, %v2126, %v2109
        %v2128 = vsel %vm396, %v2127, %v2113
        %v2129 = vpack.c.bf16 %v2121, %v2121
        %v2130 = vpack.c.bf16 %v2128, %v2128
        %v2132 = vsel %vm647, %v176, 0
        %v2135 = vsel %vm651, %v2129, 0
        %v2138 = vsel %vm651, %v2130, 0
        %2140 = vmatprep.subr.bf16.mxu0 %v2138
        %2141 = vmatpush1.bf16.msra.mxu0 %v2135
        %2142 = vmatprep.subr.bf16.mxu0 0
        %2143 = vmatpush1.bf16.msra.mxu0 0
        %2144 = vmatprep.subr.bf16.mxu0 0
        %2145 = vmatpush1.bf16.msra.mxu0 0
        %2146 = vmatprep.subr.bf16.mxu0 0
        %2147 = vmatpush1.bf16.msra.mxu0 0
        %2148 = vmatprep.subr.bf16.mxu0 0
        %2149 = vmatpush1.bf16.msra.mxu0 0
        %2150 = vmatprep.subr.bf16.mxu0 0
        %2151 = vmatpush1.bf16.msra.mxu0 0
        %2152 = vmatprep.subr.bf16.mxu0 0
        %2153 = vmatpush1.bf16.msra.mxu0 0
        %2154 = vmatprep.subr.bf16.mxu0 0
        %2155 = vmatpush1.bf16.msra.mxu0 0
        %2156 = vmatprep.subr.bf16.mxu0 0
        %2157 = vmatpush1.bf16.msra.mxu0 0
        %2158 = vmatprep.subr.bf16.mxu0 0
        %2159 = vmatpush1.bf16.msra.mxu0 0
        %2160 = vmatprep.subr.bf16.mxu0 0
        %2161 = vmatpush1.bf16.msra.mxu0 0
        %2162 = vmatprep.subr.bf16.mxu0 0
        %2163 = vmatpush1.bf16.msra.mxu0 0
        %2164 = vmatprep.subr.bf16.mxu0 0
        %2165 = vmatpush1.bf16.msra.mxu0 0
        %2166 = vmatprep.subr.bf16.mxu0 0
        %2167 = vmatpush1.bf16.msra.mxu0 0
        %2168 = vmatprep.subr.bf16.mxu0 0
        %2169 = vmatpush1.bf16.msra.mxu0 0
        %2170 = vmatprep.subr.bf16.mxu0 0
        %2171 = vmatpush1.bf16.msra.mxu0 0
        %2172 = vmatprep.mubr.bf16.mxu0 0
        %2173 = vmatmul.mubr.bf16.gmra.mrb[0].mxu0 %v2132
        %v2174 = vpop.f32.mrb[0].mxu0
        %v2175 = vadd.f32 0.0, %v2174
        %v2176 = vpop.f32.mrb[0].mxu0
        %v2177 = vadd.f32 0.0, %v2176
        %v2178 = vpop.f32.mrb[0].mxu0
        %v2179 = vpop.f32.mrb[0].mxu0
        %2180 = vdwg.mxu0
        %v2181 = vadd.f32 %v1892, %v2175
        %v2182 = vadd.f32 %v1893, %v2177
        %2183 = vrot.lane.b32.xlu0 %v1897, 127
        %v2184 = vpop.permute.xlu0 %2183
        %2185 = vrot.lane.b32.xlu0 %v1899, 127
        %v2186 = vpop.permute.xlu0 %2185
        %2187 = vrot.lane.b32.xlu0 %v1902, 127
        %v2188 = vpop.permute.xlu0 %2187
        %2189 = vrot.lane.b32.xlu0 %v1904, 127
        %v2190 = vpop.permute.xlu0 %2189
        %2191 = vrot.lane.b32.xlu0 %v1907, 127
        %v2192 = vpop.permute.xlu0 %2191
        %2193 = vrot.lane.b32.xlu0 %v1909, 127
        %v2194 = vpop.permute.xlu0 %2193
        %2195 = vrot.lane.b32.xlu0 %v1912, 127
        %v2196 = vpop.permute.xlu0 %2195
        %2197 = vrot.lane.b32.xlu0 %v1914, 127
        %v2198 = vpop.permute.xlu0 %2197
        %v2207 = vcombine.low %v2184, %v2192
        %v2208 = vcombine.high %v2184, %v2192
        %v2210 = vunpack.c.l.s4 1983009808
        %v2211 = vunpack.c.0.s8 %v2210
        %v2212 = vlaneseq
        %v2213 = vshrl.u32 %v2212, 7
        %v2214 = vsub.s32 %v2211, %v2213
        %v2215 = vrot.slane %v2207, %v2214
        %v2217 = vunpack.c.l.s4 1983009808
        %v2218 = vunpack.c.0.s8 %v2217
        %v2219 = vlaneseq
        %v2220 = vshrl.u32 %v2219, 7
        %v2221 = vsub.s32 %v2218, %v2220
        %v2222 = vrot.slane %v2208, %v2221
        %v2223 = vcombine.low %v2188, %v2196
        %v2224 = vcombine.high %v2188, %v2196
        %v2226 = vunpack.c.l.s4 1983009808
        %v2227 = vunpack.c.0.s8 %v2226
        %v2228 = vlaneseq
        %v2229 = vshrl.u32 %v2228, 7
        %v2230 = vsub.s32 %v2227, %v2229
        %v2231 = vrot.slane %v2223, %v2230
        %v2233 = vunpack.c.l.s4 1983009808
        %v2234 = vunpack.c.0.s8 %v2233
        %v2235 = vlaneseq
        %v2236 = vshrl.u32 %v2235, 7
        %v2237 = vsub.s32 %v2234, %v2236
        %v2238 = vrot.slane %v2224, %v2237
        %v2239 = vcombine.low %v2215, %v2231
        %v2240 = vcombine.high %v2215, %v2231
        %v2242 = vunpack.c.l.s4 1934713408
        %v2243 = vunpack.c.0.s8 %v2242
        %v2244 = vlaneseq
        %v2245 = vshrl.u32 %v2244, 7
        %v2246 = vsub.s32 %v2243, %v2245
        %v2247 = vrot.slane %v2239, %v2246
        %v2249 = vunpack.c.l.s4 1934713408
        %v2250 = vunpack.c.0.s8 %v2249
        %v2251 = vlaneseq
        %v2252 = vshrl.u32 %v2251, 7
        %v2253 = vsub.s32 %v2250, %v2252
        %v2254 = vrot.slane %v2240, %v2253
        %v2255 = vcombine.low %v2222, %v2238
        %v2256 = vcombine.high %v2222, %v2238
        %v2258 = vunpack.c.l.s4 1934713408
        %v2259 = vunpack.c.0.s8 %v2258
        %v2260 = vlaneseq
        %v2261 = vshrl.u32 %v2260, 7
        %v2262 = vsub.s32 %v2259, %v2261
        %v2263 = vrot.slane %v2255, %v2262
        %v2265 = vunpack.c.l.s4 1934713408
        %v2266 = vunpack.c.0.s8 %v2265
        %v2267 = vlaneseq
        %v2268 = vshrl.u32 %v2267, 7
        %v2269 = vsub.s32 %v2266, %v2268
        %v2270 = vrot.slane %v2256, %v2269
        %v2271 = vcombine.high %v2247, 0.0
        %v2272 = vcombine.high %v2254, 0.0
        %v2273 = vcombine.high %v2263, 0.0
        %v2274 = vcombine.high %v2270, 0.0
        %v2275 = vcombine.low %v2186, %v2194
        %v2276 = vcombine.high %v2186, %v2194
        %v2278 = vunpack.c.l.s4 1983009808
        %v2279 = vunpack.c.0.s8 %v2278
        %v2280 = vlaneseq
        %v2281 = vshrl.u32 %v2280, 7
        %v2282 = vsub.s32 %v2279, %v2281
        %v2283 = vrot.slane %v2275, %v2282
        %v2285 = vunpack.c.l.s4 1983009808
        %v2286 = vunpack.c.0.s8 %v2285
        %v2287 = vlaneseq
        %v2288 = vshrl.u32 %v2287, 7
        %v2289 = vsub.s32 %v2286, %v2288
        %v2290 = vrot.slane %v2276, %v2289
        %v2291 = vcombine.low %v2190, %v2198
        %v2292 = vcombine.high %v2190, %v2198
        %v2294 = vunpack.c.l.s4 1983009808
        %v2295 = vunpack.c.0.s8 %v2294
        %v2296 = vlaneseq
        %v2297 = vshrl.u32 %v2296, 7
        %v2298 = vsub.s32 %v2295, %v2297
        %v2299 = vrot.slane %v2291, %v2298
        %v2301 = vunpack.c.l.s4 1983009808
        %v2302 = vunpack.c.0.s8 %v2301
        %v2303 = vlaneseq
        %v2304 = vshrl.u32 %v2303, 7
        %v2305 = vsub.s32 %v2302, %v2304
        %v2306 = vrot.slane %v2292, %v2305
        %v2307 = vcombine.low %v2283, %v2299
        %v2308 = vcombine.high %v2283, %v2299
        %v2310 = vunpack.c.l.s4 1934713408
        %v2311 = vunpack.c.0.s8 %v2310
        %v2312 = vlaneseq
        %v2313 = vshrl.u32 %v2312, 7
        %v2314 = vsub.s32 %v2311, %v2313
        %v2315 = vrot.slane %v2307, %v2314
        %v2317 = vunpack.c.l.s4 1934713408
        %v2318 = vunpack.c.0.s8 %v2317
        %v2319 = vlaneseq
        %v2320 = vshrl.u32 %v2319, 7
        %v2321 = vsub.s32 %v2318, %v2320
        %v2322 = vrot.slane %v2308, %v2321
        %v2323 = vcombine.low %v2290, %v2306
        %v2324 = vcombine.high %v2290, %v2306
        %v2326 = vunpack.c.l.s4 1934713408
        %v2327 = vunpack.c.0.s8 %v2326
        %v2328 = vlaneseq
        %v2329 = vshrl.u32 %v2328, 7
        %v2330 = vsub.s32 %v2327, %v2329
        %v2331 = vrot.slane %v2323, %v2330
        %v2333 = vunpack.c.l.s4 1934713408
        %v2334 = vunpack.c.0.s8 %v2333
        %v2335 = vlaneseq
        %v2336 = vshrl.u32 %v2335, 7
        %v2337 = vsub.s32 %v2334, %v2336
        %v2338 = vrot.slane %v2324, %v2337
        %v2339 = vcombine.high %v2315, 0.0
        %v2340 = vcombine.high %v2322, 0.0
        %v2341 = vcombine.high %v2331, 0.0
        %v2342 = vcombine.high %v2338, 0.0
        %2344 = vrot.lane.b32.xlu0 %v2271, 16
        %v2345 = vpop.permute.xlu0 %2344
        %2348 = vrot.lane.b32.xlu0 %v2254, 32
        %v2349 = vpop.permute.xlu0 %2348
        %2352 = vrot.lane.b32.xlu0 %v2272, 48
        %v2353 = vpop.permute.xlu0 %2352
        %2356 = vrot.lane.b32.xlu0 %v2263, 64
        %v2357 = vpop.permute.xlu0 %2356
        %2360 = vrot.lane.b32.xlu0 %v2273, 80
        %v2361 = vpop.permute.xlu0 %2360
        %2364 = vrot.lane.b32.xlu0 %v2270, 96
        %v2365 = vpop.permute.xlu0 %2364
        %2368 = vrot.lane.b32.xlu0 %v2274, 112
        %v2369 = vpop.permute.xlu0 %2368
        %2372 = vrot.lane.b32.xlu0 %v2339, 16
        %v2373 = vpop.permute.xlu0 %2372
        %2376 = vrot.lane.b32.xlu0 %v2322, 32
        %v2377 = vpop.permute.xlu0 %2376
        %2380 = vrot.lane.b32.xlu0 %v2340, 48
        %v2381 = vpop.permute.xlu0 %2380
        %2384 = vrot.lane.b32.xlu0 %v2331, 64
        %v2385 = vpop.permute.xlu0 %2384
        %2388 = vrot.lane.b32.xlu0 %v2341, 80
        %v2389 = vpop.permute.xlu0 %2388
        %2392 = vrot.lane.b32.xlu0 %v2338, 96
        %v2393 = vpop.permute.xlu0 %2392
        %2396 = vrot.lane.b32.xlu0 %v2342, 112
        %v2397 = vpop.permute.xlu0 %2396
        %v2399 = vsel %vm384, %v2247, %v2345
        %v2400 = vsel %vm386, %v2399, %v2349
        %v2401 = vsel %vm388, %v2400, %v2353
        %v2402 = vsel %vm390, %v2401, %v2357
        %v2403 = vsel %vm392, %v2402, %v2361
        %v2404 = vsel %vm394, %v2403, %v2365
        %v2405 = vsel %vm396, %v2404, %v2369
        %v2406 = vsel %vm384, %v2315, %v2373
        %v2407 = vsel %vm386, %v2406, %v2377
        %v2408 = vsel %vm388, %v2407, %v2381
        %v2409 = vsel %vm390, %v2408, %v2385
        %v2410 = vsel %vm392, %v2409, %v2389
        %v2411 = vsel %vm394, %v2410, %v2393
        %v2412 = vsel %vm396, %v2411, %v2397
        %v2413 = vpack.c.bf16 %v2405, %v2405
        %v2414 = vpack.c.bf16 %v2412, %v2412
        %v2416 = vsel %vm647, %v177, 0
        %v2419 = vsel %vm651, %v2413, 0
        %v2422 = vsel %vm651, %v2414, 0
        %2424 = vmatprep.subr.bf16.mxu0 %v2422
        %2425 = vmatpush1.bf16.msra.mxu0 %v2419
        %2426 = vmatprep.subr.bf16.mxu0 0
        %2427 = vmatpush1.bf16.msra.mxu0 0
        %2428 = vmatprep.subr.bf16.mxu0 0
        %2429 = vmatpush1.bf16.msra.mxu0 0
        %2430 = vmatprep.subr.bf16.mxu0 0
        %2431 = vmatpush1.bf16.msra.mxu0 0
        %2432 = vmatprep.subr.bf16.mxu0 0
        %2433 = vmatpush1.bf16.msra.mxu0 0
        %2434 = vmatprep.subr.bf16.mxu0 0
        %2435 = vmatpush1.bf16.msra.mxu0 0
        %2436 = vmatprep.subr.bf16.mxu0 0
        %2437 = vmatpush1.bf16.msra.mxu0 0
        %2438 = vmatprep.subr.bf16.mxu0 0
        %2439 = vmatpush1.bf16.msra.mxu0 0
        %2440 = vmatprep.subr.bf16.mxu0 0
        %2441 = vmatpush1.bf16.msra.mxu0 0
        %2442 = vmatprep.subr.bf16.mxu0 0
        %2443 = vmatpush1.bf16.msra.mxu0 0
        %2444 = vmatprep.subr.bf16.mxu0 0
        %2445 = vmatpush1.bf16.msra.mxu0 0
        %2446 = vmatprep.subr.bf16.mxu0 0
        %2447 = vmatpush1.bf16.msra.mxu0 0
        %2448 = vmatprep.subr.bf16.mxu0 0
        %2449 = vmatpush1.bf16.msra.mxu0 0
        %2450 = vmatprep.subr.bf16.mxu0 0
        %2451 = vmatpush1.bf16.msra.mxu0 0
        %2452 = vmatprep.subr.bf16.mxu0 0
        %2453 = vmatpush1.bf16.msra.mxu0 0
        %2454 = vmatprep.subr.bf16.mxu0 0
        %2455 = vmatpush1.bf16.msra.mxu0 0
        %2456 = vmatprep.mubr.bf16.mxu0 0
        %2457 = vmatmul.mubr.bf16.gmra.mrb[0].mxu0 %v2416
        %v2458 = vpop.f32.mrb[0].mxu0
        %v2459 = vadd.f32 0.0, %v2458
        %v2460 = vpop.f32.mrb[0].mxu0
        %v2461 = vadd.f32 0.0, %v2460
        %v2462 = vpop.f32.mrb[0].mxu0
        %v2463 = vpop.f32.mrb[0].mxu0
        %2464 = vdwg.mxu0
        %v2465 = vadd.f32 %v2181, %v2459
        %v2466 = vadd.f32 %v2182, %v2461
        %2467 = vrot.lane.b32.xlu0 %v1897, 126
        %v2468 = vpop.permute.xlu0 %2467
        %2469 = vrot.lane.b32.xlu0 %v1899, 126
        %v2470 = vpop.permute.xlu0 %2469
        %2471 = vrot.lane.b32.xlu0 %v1902, 126
        %v2472 = vpop.permute.xlu0 %2471
        %2473 = vrot.lane.b32.xlu0 %v1904, 126
        %v2474 = vpop.permute.xlu0 %2473
        %2475 = vrot.lane.b32.xlu0 %v1907, 126
        %v2476 = vpop.permute.xlu0 %2475
        %2477 = vrot.lane.b32.xlu0 %v1909, 126
        %v2478 = vpop.permute.xlu0 %2477
        %2479 = vrot.lane.b32.xlu0 %v1912, 126
        %v2480 = vpop.permute.xlu0 %2479
        %2481 = vrot.lane.b32.xlu0 %v1914, 126
        %v2482 = vpop.permute.xlu0 %2481
        %v2491 = vcombine.low %v2468, %v2476
        %v2492 = vcombine.high %v2468, %v2476
        %v2494 = vunpack.c.l.s4 1983009808
        %v2495 = vunpack.c.0.s8 %v2494
        %v2496 = vlaneseq
        %v2497 = vshrl.u32 %v2496, 7
        %v2498 = vsub.s32 %v2495, %v2497
        %v2499 = vrot.slane %v2491, %v2498
        %v2501 = vunpack.c.l.s4 1983009808
        %v2502 = vunpack.c.0.s8 %v2501
        %v2503 = vlaneseq
        %v2504 = vshrl.u32 %v2503, 7
        %v2505 = vsub.s32 %v2502, %v2504
        %v2506 = vrot.slane %v2492, %v2505
        %v2507 = vcombine.low %v2472, %v2480
        %v2508 = vcombine.high %v2472, %v2480
        %v2510 = vunpack.c.l.s4 1983009808
        %v2511 = vunpack.c.0.s8 %v2510
        %v2512 = vlaneseq
        %v2513 = vshrl.u32 %v2512, 7
        %v2514 = vsub.s32 %v2511, %v2513
        %v2515 = vrot.slane %v2507, %v2514
        %v2517 = vunpack.c.l.s4 1983009808
        %v2518 = vunpack.c.0.s8 %v2517
        %v2519 = vlaneseq
        %v2520 = vshrl.u32 %v2519, 7
        %v2521 = vsub.s32 %v2518, %v2520
        %v2522 = vrot.slane %v2508, %v2521
        %v2523 = vcombine.low %v2499, %v2515
        %v2524 = vcombine.high %v2499, %v2515
        %v2526 = vunpack.c.l.s4 1934713408
        %v2527 = vunpack.c.0.s8 %v2526
        %v2528 = vlaneseq
        %v2529 = vshrl.u32 %v2528, 7
        %v2530 = vsub.s32 %v2527, %v2529
        %v2531 = vrot.slane %v2523, %v2530
        %v2533 = vunpack.c.l.s4 1934713408
        %v2534 = vunpack.c.0.s8 %v2533
        %v2535 = vlaneseq
        %v2536 = vshrl.u32 %v2535, 7
        %v2537 = vsub.s32 %v2534, %v2536
        %v2538 = vrot.slane %v2524, %v2537
        %v2539 = vcombine.low %v2506, %v2522
        %v2540 = vcombine.high %v2506, %v2522
        %v2542 = vunpack.c.l.s4 1934713408
        %v2543 = vunpack.c.0.s8 %v2542
        %v2544 = vlaneseq
        %v2545 = vshrl.u32 %v2544, 7
        %v2546 = vsub.s32 %v2543, %v2545
        %v2547 = vrot.slane %v2539, %v2546
        %v2549 = vunpack.c.l.s4 1934713408
        %v2550 = vunpack.c.0.s8 %v2549
        %v2551 = vlaneseq
        %v2552 = vshrl.u32 %v2551, 7
        %v2553 = vsub.s32 %v2550, %v2552
        %v2554 = vrot.slane %v2540, %v2553
        %v2555 = vcombine.high %v2531, 0.0
        %v2556 = vcombine.high %v2538, 0.0
        %v2557 = vcombine.high %v2547, 0.0
        %v2558 = vcombine.high %v2554, 0.0
        %v2559 = vcombine.low %v2470, %v2478
        %v2560 = vcombine.high %v2470, %v2478
        %v2562 = vunpack.c.l.s4 1983009808
        %v2563 = vunpack.c.0.s8 %v2562
        %v2564 = vlaneseq
        %v2565 = vshrl.u32 %v2564, 7
        %v2566 = vsub.s32 %v2563, %v2565
        %v2567 = vrot.slane %v2559, %v2566
        %v2569 = vunpack.c.l.s4 1983009808
        %v2570 = vunpack.c.0.s8 %v2569
        %v2571 = vlaneseq
        %v2572 = vshrl.u32 %v2571, 7
        %v2573 = vsub.s32 %v2570, %v2572
        %v2574 = vrot.slane %v2560, %v2573
        %v2575 = vcombine.low %v2474, %v2482
        %v2576 = vcombine.high %v2474, %v2482
        %v2578 = vunpack.c.l.s4 1983009808
        %v2579 = vunpack.c.0.s8 %v2578
        %v2580 = vlaneseq
        %v2581 = vshrl.u32 %v2580, 7
        %v2582 = vsub.s32 %v2579, %v2581
        %v2583 = vrot.slane %v2575, %v2582
        %v2585 = vunpack.c.l.s4 1983009808
        %v2586 = vunpack.c.0.s8 %v2585
        %v2587 = vlaneseq
        %v2588 = vshrl.u32 %v2587, 7
        %v2589 = vsub.s32 %v2586, %v2588
        %v2590 = vrot.slane %v2576, %v2589
        %v2591 = vcombine.low %v2567, %v2583
        %v2592 = vcombine.high %v2567, %v2583
        %v2594 = vunpack.c.l.s4 1934713408
        %v2595 = vunpack.c.0.s8 %v2594
        %v2596 = vlaneseq
        %v2597 = vshrl.u32 %v2596, 7
        %v2598 = vsub.s32 %v2595, %v2597
        %v2599 = vrot.slane %v2591, %v2598
        %v2601 = vunpack.c.l.s4 1934713408
        %v2602 = vunpack.c.0.s8 %v2601
        %v2603 = vlaneseq
        %v2604 = vshrl.u32 %v2603, 7
        %v2605 = vsub.s32 %v2602, %v2604
        %v2606 = vrot.slane %v2592, %v2605
        %v2607 = vcombine.low %v2574, %v2590
        %v2608 = vcombine.high %v2574, %v2590
        %v2610 = vunpack.c.l.s4 1934713408
        %v2611 = vunpack.c.0.s8 %v2610
        %v2612 = vlaneseq
        %v2613 = vshrl.u32 %v2612, 7
        %v2614 = vsub.s32 %v2611, %v2613
        %v2615 = vrot.slane %v2607, %v2614
        %v2617 = vunpack.c.l.s4 1934713408
        %v2618 = vunpack.c.0.s8 %v2617
        %v2619 = vlaneseq
        %v2620 = vshrl.u32 %v2619, 7
        %v2621 = vsub.s32 %v2618, %v2620
        %v2622 = vrot.slane %v2608, %v2621
        %v2623 = vcombine.high %v2599, 0.0
        %v2624 = vcombine.high %v2606, 0.0
        %v2625 = vcombine.high %v2615, 0.0
        %v2626 = vcombine.high %v2622, 0.0
        %2628 = vrot.lane.b32.xlu0 %v2555, 16
        %v2629 = vpop.permute.xlu0 %2628
        %2632 = vrot.lane.b32.xlu0 %v2538, 32
        %v2633 = vpop.permute.xlu0 %2632
        %2636 = vrot.lane.b32.xlu0 %v2556, 48
        %v2637 = vpop.permute.xlu0 %2636
        %2640 = vrot.lane.b32.xlu0 %v2547, 64
        %v2641 = vpop.permute.xlu0 %2640
        %2644 = vrot.lane.b32.xlu0 %v2557, 80
        %v2645 = vpop.permute.xlu0 %2644
        %2648 = vrot.lane.b32.xlu0 %v2554, 96
        %v2649 = vpop.permute.xlu0 %2648
        %2652 = vrot.lane.b32.xlu0 %v2558, 112
        %v2653 = vpop.permute.xlu0 %2652
        %2656 = vrot.lane.b32.xlu0 %v2623, 16
        %v2657 = vpop.permute.xlu0 %2656
        %2660 = vrot.lane.b32.xlu0 %v2606, 32
        %v2661 = vpop.permute.xlu0 %2660
        %2664 = vrot.lane.b32.xlu0 %v2624, 48
        %v2665 = vpop.permute.xlu0 %2664
        %2668 = vrot.lane.b32.xlu0 %v2615, 64
        %v2669 = vpop.permute.xlu0 %2668
        %2672 = vrot.lane.b32.xlu0 %v2625, 80
        %v2673 = vpop.permute.xlu0 %2672
        %2676 = vrot.lane.b32.xlu0 %v2622, 96
        %v2677 = vpop.permute.xlu0 %2676
        %2680 = vrot.lane.b32.xlu0 %v2626, 112
        %v2681 = vpop.permute.xlu0 %2680
        %v2683 = vsel %vm384, %v2531, %v2629
        %v2684 = vsel %vm386, %v2683, %v2633
        %v2685 = vsel %vm388, %v2684, %v2637
        %v2686 = vsel %vm390, %v2685, %v2641
        %v2687 = vsel %vm392, %v2686, %v2645
        %v2688 = vsel %vm394, %v2687, %v2649
        %v2689 = vsel %vm396, %v2688, %v2653
        %v2690 = vsel %vm384, %v2599, %v2657
        %v2691 = vsel %vm386, %v2690, %v2661
        %v2692 = vsel %vm388, %v2691, %v2665
        %v2693 = vsel %vm390, %v2692, %v2669
        %v2694 = vsel %vm392, %v2693, %v2673
        %v2695 = vsel %vm394, %v2694, %v2677
        %v2696 = vsel %vm396, %v2695, %v2681
        %v2697 = vpack.c.bf16 %v2689, %v2689
        %v2698 = vpack.c.bf16 %v2696, %v2696
        %v2700 = vsel %vm647, %v178, 0
        %v2703 = vsel %vm651, %v2697, 0
        %v2706 = vsel %vm651, %v2698, 0
        %2708 = vmatprep.subr.bf16.mxu0 %v2706
        %2709 = vmatpush1.bf16.msra.mxu0 %v2703
        %2710 = vmatprep.subr.bf16.mxu0 0
        %2711 = vmatpush1.bf16.msra.mxu0 0
        %2712 = vmatprep.subr.bf16.mxu0 0
        %2713 = vmatpush1.bf16.msra.mxu0 0
        %2714 = vmatprep.subr.bf16.mxu0 0
        %2715 = vmatpush1.bf16.msra.mxu0 0
        %2716 = vmatprep.subr.bf16.mxu0 0
        %2717 = vmatpush1.bf16.msra.mxu0 0
        %2718 = vmatprep.subr.bf16.mxu0 0
        %2719 = vmatpush1.bf16.msra.mxu0 0
        %2720 = vmatprep.subr.bf16.mxu0 0
        %2721 = vmatpush1.bf16.msra.mxu0 0
        %2722 = vmatprep.subr.bf16.mxu0 0
        %2723 = vmatpush1.bf16.msra.mxu0 0
        %2724 = vmatprep.subr.bf16.mxu0 0
        %2725 = vmatpush1.bf16.msra.mxu0 0
        %2726 = vmatprep.subr.bf16.mxu0 0
        %2727 = vmatpush1.bf16.msra.mxu0 0
        %2728 = vmatprep.subr.bf16.mxu0 0
        %2729 = vmatpush1.bf16.msra.mxu0 0
        %2730 = vmatprep.subr.bf16.mxu0 0
        %2731 = vmatpush1.bf16.msra.mxu0 0
        %2732 = vmatprep.subr.bf16.mxu0 0
        %2733 = vmatpush1.bf16.msra.mxu0 0
        %2734 = vmatprep.subr.bf16.mxu0 0
        %2735 = vmatpush1.bf16.msra.mxu0 0
        %2736 = vmatprep.subr.bf16.mxu0 0
        %2737 = vmatpush1.bf16.msra.mxu0 0
        %2738 = vmatprep.subr.bf16.mxu0 0
        %2739 = vmatpush1.bf16.msra.mxu0 0
        %2740 = vmatprep.mubr.bf16.mxu0 0
        %2741 = vmatmul.mubr.bf16.gmra.mrb[0].mxu0 %v2700
        %v2742 = vpop.f32.mrb[0].mxu0
        %v2743 = vadd.f32 0.0, %v2742
        %v2744 = vpop.f32.mrb[0].mxu0
        %v2745 = vadd.f32 0.0, %v2744
        %v2746 = vpop.f32.mrb[0].mxu0
        %v2747 = vpop.f32.mrb[0].mxu0
        %2748 = vdwg.mxu0
        %v2749 = vadd.f32 %v2465, %v2743
        %v2750 = vadd.f32 %v2466, %v2745
        %2752 = vset.pattern.permute.xlu0 0
        %2753 = vperm.xlu0 %2752, %v179
        %v2754 = vpop.permute.xlu0 %2753
        %v2756 = vadd.f32 %v2749, %v2754
        %v2757 = vadd.f32 %v2750, %v2754
        %2758 = vst [vmem:[%s163] sm:$0xff] %v2756
        %2759 = vst [vmem:[%s163 + $0x8] sm:$0xff] %v2757
        %s2760 = sand.u32 %s93, 1
        %s2761 = scalar_lea.sflag [#allocation3], %s2760
        %s2762 = sand.u32 %s93, 1
        %s2763 = smul.addr %s2762, 16
        %s2764 = scalar_lea.vmem [#allocation2], %s2763
        // Predicated region
        $region33: #{tpu_custom_call.1} parent=31 // pred_check
          %p2765 = pneg %p103
        $region34: #{tpu_custom_call.1} parent=31 // pred_check_branch
          %2767 = sbr.rel (%p2765) target = $region36
        $region35: #{tpu_custom_call.1} parent=31 // pred_region
          %s2769 = ssub.s32 256, 256
          %2770 = vsyncadd %s2761, %s2769
          %s2771 = smul.addr %s17, 2
          %s2772 = smul.addr %s2771, 128
          %s2773 = scalar_lea.hbm %s3, %s2772
          %s2775 = sshll.u32 %s2764, 4
          %s2776 = int_to_ptr.vmem [resolvable:$true] %s2775
          %2778 = dma.vmem_to_hbm [thread:$0]  %s2776, 256, %s2773, %s2761
        $region36: #{tpu_custom_call.1} parent=31 // pred_fallthru
          _
      $region32: #{tpu_custom_call.1} parent=5 // pred_fallthru
        _
      %p2779 = scmp.le.s32.totalorder 2, %s12
      // Predicated region
      $region37: #{tpu_custom_call.1} parent=5 // pred_check
        %p2780 = pneg %p2779
      $region38: #{tpu_custom_call.1} parent=5 // pred_check_branch
        %2782 = sbr.rel (%p2780) target = $region40
      $region39: #{tpu_custom_call.1} parent=5 // pred_region
        %s2783 = ssub.s32 %s12, 2
        // Predicated region
        $region41: #{tpu_custom_call.1} parent=39 // pred_check
          %p2784 = pneg %p109
        $region42: #{tpu_custom_call.1} parent=39 // pred_check_branch
          %2786 = sbr.rel (%p2784) target = $region44
        $region43: #{tpu_custom_call.1} parent=39 // pred_region
          %s2787 = sand.u32 %s94, 1
          %s2788 = scalar_lea.sflag [#allocation3], %s2787
          %s2789 = sand.u32 %s94, 1
          %s2790 = smul.addr %s2789, 16
          %s2791 = scalar_lea.vmem [#allocation2], %s2790
          %2792 = dma.done %s2788, 256
        $region44: #{tpu_custom_call.1} parent=39 // pred_fallthru
          _
      $region40: #{tpu_custom_call.1} parent=5 // pred_fallthru
        _
    $region6: #{tpu_custom_call.1} parent=1 // loop_footer
      %s16 = sadd.s32 1, %s12
    $region7: #{tpu_custom_call.1} parent=1 // loop_footer_branch
      %11 = sbr.rel target = $region3
    $region8: #{tpu_custom_call.1} parent=1 // loop_exit
      _
    %2793 = vsyncpa [#allocation3], 1
    %s2794 = scalar_lea.sflag [#allocation3], 1
    %2795 = vsyncpa %s2794, 1

</llo_original>
